<compile_context>
chip_gen: v7x
topology: tpu7x:2x2x1
jax: 0.10.0
libtpu: 0.0.40
codegen_flags: <defaults>
</compile_context>

<pallas_src>
import functools

import jax
import jax.numpy as jnp
from jax.experimental import pallas as pl
from jax.experimental.pallas import tpu as pltpu


# --------------------------------------------------------------------------
# helpers
# --------------------------------------------------------------------------
def _round_up(x, m):
    return (x + m - 1) // m * m


def _largest_divisor_leq(total, target):
    """Largest divisor of `total` that is <= target (>= 1)."""
    target = max(1, min(int(total), int(target)))
    for d in range(target, 0, -1):
        if total % d == 0:
            return d
    return 1


def _default_vmem_limit_bytes():
    cap = 64 * 1024 * 1024            # conservative fallback (v7x: 64 MiB / TC)
    try:
        cap = int(pltpu.get_tpu_info().vmem_capacity_bytes)
    except Exception:
        pass
    # ~3/4 of physical, capped at 96 MiB (v5e/v6e have 128 MiB, v7x has 64 MiB).
    return int(min(cap * 3 // 4, 96 * 1024 * 1024))


# --------------------------------------------------------------------------
# pass 1: depthwise 3x3 conv (+ BN1 partial stats); y written in bf16
# --------------------------------------------------------------------------
def _dw_conv_kernel(*refs, stride, has_top, has_bot):
    it = iter(refs)
    x_ref = next(it)
    top_ref = next(it) if has_top else None
    bot_ref = next(it) if has_bot else None
    w_ref, y_ref, st_ref, pad_ref = it

    i = pl.program_id(1)
    nrt = pl.num_programs(1)
    trs, W, C = x_ref.shape            # body rows (= out_rows*stride), width, Cin_p
    tro, wo, _ = y_ref.shape           # output rows / cols of this tile

    # ---- assemble the zero-padded input tile (1-px halo) in VMEM scratch ----
    # TODO(synk): a roll-based column halo (pltpu.roll + edge masking) would
    # drop this full-body copy (vst-bound on v5e) and halve the pass-1 scratch.
    pad_ref[:, 0:1, :] = jnp.zeros((trs + 2, 1, C), jnp.float32)
    pad_ref[:, W + 1:W + 2, :] = jnp.zeros((trs + 2, 1, C), jnp.float32)
    pad_ref[1:trs + 1, 1:W + 1, :] = x_ref[...]

    zrow = jnp.zeros((1, W, C), jnp.float32)

    # top halo row: zero at the image border, neighbour row otherwise
    if has_top:
        @pl.when(i == 0)
        def _():
            pad_ref[0:1, 1:W + 1, :] = zrow

        @pl.when(i > 0)
        def _():
            pad_ref[0:1, 1:W + 1, :] = top_ref[...]
    else:
        pad_ref[0:1, 1:W + 1, :] = zrow

    # bottom halo row is only ever read when stride == 1
    if stride == 1:
        if has_bot:
            @pl.when(i == nrt - 1)
            def _():
                pad_ref[trs + 1:trs + 2, 1:W + 1, :] = zrow

            @pl.when(i < nrt - 1)
            def _():
                pad_ref[trs + 1:trs + 2, 1:W + 1, :] = bot_ref[...]
        else:
            pad_ref[trs + 1:trs + 2, 1:W + 1, :] = zrow

    w = w_ref[...]                     # (9, C), row = ky*3 + kx

    def tap(ky, kx):
        # Only the outputs we actually need: strided patch reads for s > 1.
        if stride == 1:
            return pad_ref[ky:ky + tro, kx:kx + wo, :]
        return pad_ref[pl.ds(ky, tro, stride=stride),
                       pl.ds(kx, wo, stride=stride), :]

    # first tap is a direct assignment (no zeros-init + add)
    acc = tap(0, 0) * w[0:1][None]
    for t in range(1, 9):
        ky, kx = divmod(t, 3)
        acc = acc + tap(ky, kx) * w[t:t + 1][None]
    # TODO(synk): on v6e/v7x the 9 tap multiplies could run as packed bf16 VPU
    # ops accumulating into f32 to relieve the VALU bound (keep f32 on v5e).

    # bf16 writeback halves inter-pass HBM traffic; stats stay f32-exact.
    y_ref[...] = acc.astype(y_ref.dtype)

    # per-tile BN1 partials: sum and sum-of-squares per channel (from f32 acc)
    st_ref[0:1, :] = jnp.sum(jnp.sum(acc, axis=0), axis=0, keepdims=True)
    st_ref[1:2, :] = jnp.sum(jnp.sum(acc * acc, axis=0), axis=0, keepdims=True)


# --------------------------------------------------------------------------
# pass 2: BN1 affine + ReLU + pointwise 1x1 conv on the MXU (+ BN2 partials)
# --------------------------------------------------------------------------
def _pw_bn1_kernel(y_ref, a1_ref, c1_ref, w_ref, z_ref, st_ref, *,
                   matmul_dtype, m_total, ragged):
    y = jnp.maximum(y_ref[...].astype(jnp.float32) * a1_ref[...] + c1_ref[...],
                    0.0)                                            # BN1 + ReLU
    if ragged:
        # Mask the padding rows of the last (partial) tile so the BN2 partial
        # sums (and the matmul rows feeding them) stay exact.
        tm = y.shape[0]
        m = pl.program_id(0)
        row = jax.lax.broadcasted_iota(jnp.int32, (tm, 1), 0)
        y = jnp.where(row + m * tm < m_total, y, 0.0)
    z = jnp.dot(y.astype(matmul_dtype), w_ref[...],
                preferred_element_type=jnp.float32)                 # f32 accum
    z_ref[...] = z.astype(z_ref.dtype)                              # bf16 store
    st_ref[0:1, :] = jnp.sum(z, axis=0, keepdims=True)              # from f32 z
    st_ref[1:2, :] = jnp.sum(z * z, axis=0, keepdims=True)


# --------------------------------------------------------------------------
# pass 3: BN2 affine + ReLU
# --------------------------------------------------------------------------
def _bn2_relu_kernel(z_ref, a2_ref, c2_ref, o_ref):
    z = z_ref[...].astype(jnp.float32)
    o_ref[...] = jnp.maximum(z * a2_ref[...] + c2_ref[...], 0.0).astype(o_ref.dtype)


# --------------------------------------------------------------------------
# wrapper
# --------------------------------------------------------------------------
def block_forward_nhwc(x, params, *, stride=1, eps=1e-5, row_tile=None,
                       m_tile=None, intermediate_dtype=jnp.bfloat16,
                       matmul_dtype=jnp.bfloat16, out_dtype=None,
                       vmem_limit_bytes=None):
    """Block forward on NHWC activations.

    Defaults favour throughput: bf16 intermediates / bf16 MXU operands with f32
    accumulation and f32 BN statistics.  Pass intermediate_dtype=matmul_dtype=
    jnp.float32 for exact-parity numerics."""
    N, H, W, Cin = x.shape
    Cout = params["pw_w"].shape[1]
    if stride > 1 and (H % stride or W % stride):
        # TODO(synk): stride>1 with non-divisible spatial extents needs a ragged
        # last row tile (same cdiv+mask treatment as the M tiling below).
        raise NotImplementedError("stride>1 requires H and W divisible by stride")
    Ho, Wo = H // stride, W // stride
    out_dtype = x.dtype if out_dtype is None else out_dtype
    if vmem_limit_bytes is None:
        vmem_limit_bytes = _default_vmem_limit_bytes()

    cpi = _round_up(Cin, 128)
    cpo = _round_up(Cout, 128)

    # Channel padding to the 128-lane width (model-boundary layout decision).
    # TODO(synk): in a full network keep activations channel-padded NHWC (bf16)
    # end-to-end and fuse pass 3 into the next block's pass-1 load; the pads and
    # casts here each cost one extra HBM sweep outside the kernels.
    xf = x.astype(jnp.float32)
    if cpi != Cin:
        xf = jnp.pad(xf, ((0, 0), (0, 0), (0, 0), (0, cpi - Cin)))
    dw = jnp.pad(params["dw_w"].astype(jnp.float32), ((0, 0), (0, cpi - Cin)))
    pw = jnp.pad(params["pw_w"].astype(jnp.float32),
                 ((0, cpi - Cin), (0, cpo - Cout))).astype(matmul_dtype)
    g1 = jnp.pad(params["g1"].astype(jnp.float32), (0, cpi - Cin))
    b1 = jnp.pad(params["b1"].astype(jnp.float32), (0, cpi - Cin))
    g2 = jnp.pad(params["g2"].astype(jnp.float32), (0, cpo - Cout))
    b2 = jnp.pad(params["b2"].astype(jnp.float32), (0, cpo - Cout))

    item_i = jnp.dtype(intermediate_dtype).itemsize

    # ---- row tiling for the depthwise pass (budget ~60% of the VMEM limit) ---
    if row_tile is None:
        per_row = (2 * stride * W * 4          # x body, double-buffered (f32)
                   + stride * (W + 2) * 4      # padded-tile scratch
                   + 2 * Wo * item_i) * cpi    # y out, double-buffered
        row_tile = max(1, int(0.6 * vmem_limit_bytes) // per_row)
    tro = _largest_divisor_leq(Ho, row_tile)
    nrt = Ho // tro
    trs = tro * stride
    has_top = nrt > 1
    has_bot = (stride == 1) and (nrt > 1)   # bottom halo never read when s >= 2

    cparams = functools.partial(pltpu.CompilerParams,
                                vmem_limit_bytes=vmem_limit_bytes)

    # ---- pass 1: depthwise conv + BN1 partials -------------------------------
    in_specs1 = [pl.BlockSpec((None, trs, W, cpi), lambda n, i: (n, i, 0, 0))]
    args1 = [xf]
    if has_top:
        in_specs1.append(pl.BlockSpec(
            (None, 1, W, cpi), lambda n, i: (n, jnp.maximum(i * trs - 1, 0), 0, 0)))
        args1.append(xf)
    if has_bot:
        in_specs1.append(pl.BlockSpec(
            (None, 1, W, cpi), lambda n, i: (n, jnp.minimum((i + 1) * trs, H - 1), 0, 0)))
        args1.append(xf)
    in_specs1.append(pl.BlockSpec((9, cpi), lambda n, i: (0, 0)))
    args1.append(dw)

    y, st1 = pl.pallas_call(
        functools.partial(_dw_conv_kernel, stride=stride,
                          has_top=has_top, has_bot=has_bot),
        grid=(N, nrt),
        in_specs=in_specs1,
        out_specs=[
            pl.BlockSpec((None, tro, Wo, cpi), lambda n, i: (n, i, 0, 0)),
            pl.BlockSpec((None, None, 2, cpi), lambda n, i: (n, i, 0, 0)),
        ],
        out_shape=[
            jax.ShapeDtypeStruct((N, Ho, Wo, cpi), intermediate_dtype),
            jax.ShapeDtypeStruct((N, nrt, 2, cpi), jnp.float32),
        ],
        scratch_shapes=[pltpu.VMEM((trs + 2, W + 2, cpi), jnp.float32)],
        compiler_params=cparams(dimension_semantics=("parallel", "parallel")),
    )(*args1)

    # BN1 global (training-mode, biased) stats -> per-channel affine
    # TODO(synk): for real MobileNet counts (~N*112*112) merge per-tile
    # (count, mean, M2) partials (Chan/Welford) instead of E[x^2]-E[x]^2.
    cnt1 = jnp.float32(N * Ho * Wo)
    s1 = jnp.sum(st1, axis=(0, 1))                         # (2, cpi)
    mu1 = s1[0] / cnt1
    var1 = jnp.maximum(s1[1] / cnt1 - mu1 * mu1, 0.0)
    inv1 = jax.lax.rsqrt(var1 + eps)
    a1 = (g1 * inv1)[None, :]
    c1 = (b1 - mu1 * g1 * inv1)[None, :]

    # ---- pass 2: BN1+ReLU + pointwise matmul + BN2 partials -------------------
    M = N * Ho * Wo
    y2 = y.reshape(M, cpi)                                 # major-dim collapse

    if m_tile is None:
        fixed = 2 * cpi * cpo * jnp.dtype(matmul_dtype).itemsize
        per_row2 = (2 * cpi * item_i
                    + 2 * cpo * (item_i + jnp.dtype(out_dtype).itemsize))
        m_tile = max(256, int((0.5 * vmem_limit_bytes - fixed) // per_row2))
    if M <= m_tile:
        tm, nmt, ragged = M, 1, False                      # full extent is legal
    else:
        tm = max(16, (min(m_tile, M) // 16) * 16)          # bf16 sublane multiple
        nmt = -(-M // tm)                                  # cdiv: ragged last tile
        ragged = (M % tm) != 0

    z, st2 = pl.pallas_call(
        functools.partial(_pw_bn1_kernel, matmul_dtype=matmul_dtype,
                          m_total=M, ragged=ragged),
        grid=(nmt,),
        in_specs=[
            pl.BlockSpec((tm, cpi), lambda m: (m, 0)),
            pl.BlockSpec((1, cpi), lambda m: (0, 0)),
            pl.BlockSpec((1, cpi), lambda m: (0, 0)),
            # TODO(synk): on v7x mark this grid-constant weight with
            # pipeline_mode=pl.Buffered(1) to save one cpi*cpo VMEM buffer.
            pl.BlockSpec((cpi, cpo), lambda m: (0, 0)),
        ],
        out_specs=[
            pl.BlockSpec((tm, cpo), lambda m: (m, 0)),
            pl.BlockSpec((None, 2, cpo), lambda m: (m, 0, 0)),
        ],
        out_shape=[
            jax.ShapeDtypeStruct((M, cpo), intermediate_dtype),
            jax.ShapeDtypeStruct((nmt, 2, cpo), jnp.float32),
        ],
        compiler_params=cparams(dimension_semantics=("parallel",)),
    )(y2, a1, c1, pw)

    # BN2 global stats -> affine
    s2 = jnp.sum(st2, axis=0)
    mu2 = s2[0] / jnp.float32(M)
    var2 = jnp.maximum(s2[1] / jnp.float32(M) - mu2 * mu2, 0.0)
    inv2 = jax.lax.rsqrt(var2 + eps)
    a2 = (g2 * inv2)[None, :]
    c2 = (b2 - mu2 * g2 * inv2)[None, :]

    # ---- pass 3: BN2 + ReLU ---------------------------------------------------
    out2d = pl.pallas_call(
        _bn2_relu_kernel,
        grid=(nmt,),
        in_specs=[
            pl.BlockSpec((tm, cpo), lambda m: (m, 0)),
            pl.BlockSpec((1, cpo), lambda m: (0, 0)),
            pl.BlockSpec((1, cpo), lambda m: (0, 0)),
        ],
        out_specs=pl.BlockSpec((tm, cpo), lambda m: (m, 0)),
        out_shape=jax.ShapeDtypeStruct((M, cpo), out_dtype),
        compiler_params=cparams(dimension_semantics=("parallel",)),
    )(z, a2, c2)

    out = out2d.reshape(N, Ho, Wo, cpo)
    return out[..., :Cout] if cpo != Cout else out


def block_forward(x_nchw, params, *, stride=1, eps=1e-5, **kw):
    """NCHW adapter for parity with the PyTorch module.  In a full network keep
    activations NHWC (channel-padded) end-to-end and call block_forward_nhwc."""
    x = jnp.transpose(x_nchw, (0, 2, 3, 1))
    out = block_forward_nhwc(x, params, stride=stride, eps=eps, **kw)
    return jnp.transpose(out, (0, 3, 1, 2))


# --------------------------------------------------------------------------
# pure-JAX reference (mirrors the PyTorch module in training-mode BN)
# --------------------------------------------------------------------------
def _reference(x_nchw, params, *, stride=1, eps=1e-5):
    Cin = x_nchw.shape[1]
    dw = jnp.transpose(params["dw_w"].reshape(3, 3, Cin), (2, 0, 1))[:, None]  # (Cin,1,3,3)
    y = jax.lax.conv_general_dilated(
        x_nchw, dw, (stride, stride), ((1, 1), (1, 1)),
        dimension_numbers=("NCHW", "OIHW", "NCHW"), feature_group_count=Cin)

    def bn_relu(t, g, b):
        mu = jnp.mean(t, axis=(0, 2, 3), keepdims=True)
        var = jnp.mean((t - mu) ** 2, axis=(0, 2, 3), keepdims=True)
        t = (t - mu) * jax.lax.rsqrt(var + eps)
        t = t * g.reshape(1, -1, 1, 1) + b.reshape(1, -1, 1, 1)
        return jnp.maximum(t, 0.0)

    y = bn_relu(y, params["g1"], params["b1"])
    pw = params["pw_w"].T[:, :, None, None]                                    # (Cout,Cin,1,1)
    z = jax.lax.conv_general_dilated(
        y, pw, (1, 1), ((0, 0), (0, 0)),
        dimension_numbers=("NCHW", "OIHW", "NCHW"))
    return bn_relu(z, params["g2"], params["b2"])


def make_params(key, in_planes, out_planes):
    k1, k2, k3, k4, k5, k6 = jax.random.split(key, 6)
    return {
        # depthwise weight: PyTorch (Cin,1,3,3) stored as (9, Cin), row = ky*3+kx
        "dw_w": jax.random.normal(k1, (9, in_planes), jnp.float32) * 0.2,
        # pointwise weight: PyTorch (Cout,Cin,1,1) stored as (Cin, Cout)
        "pw_w": jax.random.normal(k2, (in_planes, out_planes), jnp.float32) * 0.2,
        "g1": jax.random.uniform(k3, (in_planes,), jnp.float32, 0.5, 1.5),
        "b1": jax.random.normal(k4, (in_planes,), jnp.float32) * 0.1,
        "g2": jax.random.uniform(k5, (out_planes,), jnp.float32, 0.5, 1.5),
        "b2": jax.random.normal(k6, (out_planes,), jnp.float32) * 0.1,
    }


if __name__ == "__main__":
    key = jax.random.PRNGKey(0)
    kx_, kp_ = jax.random.split(key)

    N, Cin, Hs, Ws = 2, 4, 16, 16
    Cout, stride = 8, 1

    x = jax.random.normal(kx_, (N, Cin, Hs, Ws), jnp.float32)   # NCHW like PyTorch
    params = make_params(kp_, Cin, Cout)
    ref = _reference(x, params, stride=stride)

    # 1) Fast path (defaults: bf16 intermediates + bf16 MXU operands, f32 stats).
    #    Small tiles exercise the multi-tile halo path (2 row tiles) and the
    #    cdiv-based ragged M tiling (M=512, tm=96 -> 6 tiles, last one masked).
    #    bf16 rounding through two batch-norm normalizations -> loose tolerance.
    out = block_forward(x, params, stride=stride, row_tile=8, m_tile=96)
    out = jax.block_until_ready(out)
    assert out.shape == (N, Cout, Hs // stride, Ws // stride), out.shape
    assert jnp.allclose(out, ref, rtol=2e-1, atol=2e-1), \
        float(jnp.max(jnp.abs(out - ref)))

    # 2) Exact-parity path: f32 intermediates + f32 matmul, divisible tiles.
    out32 = block_forward(x, params, stride=stride, row_tile=8, m_tile=128,
                          intermediate_dtype=jnp.float32,
                          matmul_dtype=jnp.float32)
    out32 = jax.block_until_ready(out32)
    assert jnp.allclose(out32, ref, rtol=2e-4, atol=2e-4), \
        float(jnp.max(jnp.abs(out32 - ref)))

    # 3) Default auto-tiled configuration (VMEM-budget-derived tiles; single
    #    row tile and single M tile at this small size).
    out_d = block_forward(x, params, stride=stride)
    out_d = jax.block_until_ready(out_d)
    assert jnp.allclose(out_d, ref, rtol=2e-1, atol=2e-1), \
        float(jnp.max(jnp.abs(out_d - ref)))

    print("KERNEL_OK")
</pallas_src>

<mosaic_0001>
module attributes {stable_mosaic.version = 11 : i64} {
  func.func @_dw_conv_kernel(%arg0: i32, %arg1: i32, %arg2: memref<1x8x16x128xf32, #tpu.memory_space<vmem>>, %arg3: memref<1x1x16x128xf32, #tpu.memory_space<vmem>>, %arg4: memref<1x1x16x128xf32, #tpu.memory_space<vmem>>, %arg5: memref<9x128xf32, #tpu.memory_space<vmem>>, %arg6: memref<1x8x16x128xbf16, #tpu.memory_space<vmem>>, %arg7: memref<1x1x2x128xf32, #tpu.memory_space<vmem>>, %arg8: memref<10x18x128xf32, #tpu.memory_space<vmem>>) attributes {dimension_semantics = [#tpu.dimension_semantics<parallel>, #tpu.dimension_semantics<parallel>], iteration_bounds = array<i64: 2, 2>, scalar_prefetch = 0 : i64, scratch_operands = 1 : i64, tpu.core_type = #tpu.core_type<tc>, window_params = [{transform_indices = @transform_0, window_bounds = array<i64: 1, 8, 16, 128>}, {transform_indices = @transform_1, window_bounds = array<i64: 1, 1, 16, 128>}, {transform_indices = @transform_2, window_bounds = array<i64: 1, 1, 16, 128>}, {pipeline_mode = #tpu.pipeline_mode<synchronous>, transform_indices = @transform_3, window_bounds = array<i64: 9, 128>}, {transform_indices = @transform_4, window_bounds = array<i64: 1, 8, 16, 128>}, {transform_indices = @transform_5, window_bounds = array<i64: 1, 1, 2, 128>}]} {
    %cst = arith.constant 0.000000e+00 : f32
    %0 = vector.broadcast %cst : f32 to vector<10x1x128xf32>
    %c0 = arith.constant 0 : index
    %c0_0 = arith.constant 0 : index
    %c0_1 = arith.constant 0 : index
    %1 = vector.load %arg8[%c0, %c0_0, %c0_1] : memref<10x18x128xf32, #tpu.memory_space<vmem>>, vector<10x1x128xf32>
    tpu.vector_store %arg8[%c0, %c0_0, %c0_1], %0 {strides = array<i32>} : memref<10x18x128xf32, #tpu.memory_space<vmem>>, vector<10x1x128xf32>,
    %cst_2 = arith.constant 0.000000e+00 : f32
    %2 = vector.broadcast %cst_2 : f32 to vector<10x1x128xf32>
    %c0_3 = arith.constant 0 : index
    %c17 = arith.constant 17 : index
    %c0_4 = arith.constant 0 : index
    %3 = vector.load %arg8[%c0_3, %c17, %c0_4] : memref<10x18x128xf32, #tpu.memory_space<vmem>>, vector<10x1x128xf32>
    tpu.vector_store %arg8[%c0_3, %c17, %c0_4], %2 {strides = array<i32>} : memref<10x18x128xf32, #tpu.memory_space<vmem>>, vector<10x1x128xf32>,
    %c0_5 = arith.constant 0 : index
    %c0_6 = arith.constant 0 : index
    %c0_7 = arith.constant 0 : index
    %c0_8 = arith.constant 0 : index
    %4 = vector.load %arg2[%c0_5, %c0_6, %c0_7, %c0_8] : memref<1x8x16x128xf32, #tpu.memory_space<vmem>>, vector<1x8x16x128xf32>
    %5 = vector.shape_cast %4 : vector<1x8x16x128xf32> to vector<8x16x128xf32>
    %c1 = arith.constant 1 : index
    %c1_9 = arith.constant 1 : index
    %c0_10 = arith.constant 0 : index
    %6 = vector.load %arg8[%c1, %c1_9, %c0_10] : memref<10x18x128xf32, #tpu.memory_space<vmem>>, vector<8x16x128xf32>
    tpu.vector_store %arg8[%c1, %c1_9, %c0_10], %5 {strides = array<i32>} : memref<10x18x128xf32, #tpu.memory_space<vmem>>, vector<8x16x128xf32>,
    %cst_11 = arith.constant 0.000000e+00 : f32
    %7 = vector.broadcast %cst_11 : f32 to vector<1x16x128xf32>
    %c0_i32 = arith.constant 0 : i32
    %8 = arith.cmpi eq, %arg1, %c0_i32 : i32
    %9 = arith.extui %8 : i1 to i32
    %c0_i32_12 = arith.constant 0 : i32
    %10 = arith.cmpi ne, %9, %c0_i32_12 : i32
    scf.if %10 {
      %c0_62 = arith.constant 0 : index
      %c1_63 = arith.constant 1 : index
      %c0_64 = arith.constant 0 : index
      %91 = vector.load %arg8[%c0_62, %c1_63, %c0_64] : memref<10x18x128xf32, #tpu.memory_space<vmem>>, vector<1x16x128xf32>
      tpu.vector_store %arg8[%c0_62, %c1_63, %c0_64], %7 {strides = array<i32>} : memref<10x18x128xf32, #tpu.memory_space<vmem>>, vector<1x16x128xf32>,
    } else {
    }
    %c0_i32_13 = arith.constant 0 : i32
    %11 = arith.cmpi sgt, %arg1, %c0_i32_13 : i32
    %12 = arith.extui %11 : i1 to i32
    %c0_i32_14 = arith.constant 0 : i32
    %13 = arith.cmpi ne, %12, %c0_i32_14 : i32
    scf.if %13 {
      %c0_62 = arith.constant 0 : index
      %c0_63 = arith.constant 0 : index
      %c0_64 = arith.constant 0 : index
      %c0_65 = arith.constant 0 : index
      %91 = vector.load %arg3[%c0_62, %c0_63, %c0_64, %c0_65] : memref<1x1x16x128xf32, #tpu.memory_space<vmem>>, vector<1x1x16x128xf32>
      %92 = vector.shape_cast %91 : vector<1x1x16x128xf32> to vector<1x16x128xf32>
      %c0_66 = arith.constant 0 : index
      %c1_67 = arith.constant 1 : index
      %c0_68 = arith.constant 0 : index
      %93 = vector.load %arg8[%c0_66, %c1_67, %c0_68] : memref<10x18x128xf32, #tpu.memory_space<vmem>>, vector<1x16x128xf32>
      tpu.vector_store %arg8[%c0_66, %c1_67, %c0_68], %92 {strides = array<i32>} : memref<10x18x128xf32, #tpu.memory_space<vmem>>, vector<1x16x128xf32>,
    } else {
    }
    %c1_i32 = arith.constant 1 : i32
    %14 = arith.cmpi eq, %arg1, %c1_i32 : i32
    %15 = arith.extui %14 : i1 to i32
    %c0_i32_15 = arith.constant 0 : i32
    %16 = arith.cmpi ne, %15, %c0_i32_15 : i32
    scf.if %16 {
      %c9 = arith.constant 9 : index
      %c1_62 = arith.constant 1 : index
      %c0_63 = arith.constant 0 : index
      %91 = vector.load %arg8[%c9, %c1_62, %c0_63] : memref<10x18x128xf32, #tpu.memory_space<vmem>>, vector<1x16x128xf32>
      tpu.vector_store %arg8[%c9, %c1_62, %c0_63], %7 {strides = array<i32>} : memref<10x18x128xf32, #tpu.memory_space<vmem>>, vector<1x16x128xf32>,
    } else {
    }
    %c1_i32_16 = arith.constant 1 : i32
    %17 = arith.cmpi slt, %arg1, %c1_i32_16 : i32
    %18 = arith.extui %17 : i1 to i32
    %c0_i32_17 = arith.constant 0 : i32
    %19 = arith.cmpi ne, %18, %c0_i32_17 : i32
    scf.if %19 {
      %c0_62 = arith.constant 0 : index
      %c0_63 = arith.constant 0 : index
      %c0_64 = arith.constant 0 : index
      %c0_65 = arith.constant 0 : index
      %91 = vector.load %arg4[%c0_62, %c0_63, %c0_64, %c0_65] : memref<1x1x16x128xf32, #tpu.memory_space<vmem>>, vector<1x1x16x128xf32>
      %92 = vector.shape_cast %91 : vector<1x1x16x128xf32> to vector<1x16x128xf32>
      %c9 = arith.constant 9 : index
      %c1_66 = arith.constant 1 : index
      %c0_67 = arith.constant 0 : index
      %93 = vector.load %arg8[%c9, %c1_66, %c0_67] : memref<10x18x128xf32, #tpu.memory_space<vmem>>, vector<1x16x128xf32>
      tpu.vector_store %arg8[%c9, %c1_66, %c0_67], %92 {strides = array<i32>} : memref<10x18x128xf32, #tpu.memory_space<vmem>>, vector<1x16x128xf32>,
    } else {
    }
    %c0_18 = arith.constant 0 : index
    %c0_19 = arith.constant 0 : index
    %20 = vector.load %arg5[%c0_18, %c0_19] : memref<9x128xf32, #tpu.memory_space<vmem>>, vector<9x128xf32>
    %c0_20 = arith.constant 0 : index
    %c0_21 = arith.constant 0 : index
    %c0_22 = arith.constant 0 : index
    %21 = vector.load %arg8[%c0_20, %c0_21, %c0_22] : memref<10x18x128xf32, #tpu.memory_space<vmem>>, vector<8x16x128xf32>
    %22 = vector.extract_strided_slice %20 {offsets = [0, 0], sizes = [1, 128], strides = [1, 1]} : vector<9x128xf32> to vector<1x128xf32>
    %23 = vector.shape_cast %22 : vector<1x128xf32> to vector<1x1x128xf32>
    %24 = vector.broadcast %23 : vector<1x1x128xf32> to vector<8x16x128xf32>
    %25 = arith.mulf %21, %24 : vector<8x16x128xf32>
    %c0_23 = arith.constant 0 : index
    %c1_24 = arith.constant 1 : index
    %c0_25 = arith.constant 0 : index
    %26 = vector.load %arg8[%c0_23, %c1_24, %c0_25] : memref<10x18x128xf32, #tpu.memory_space<vmem>>, vector<8x16x128xf32>
    %27 = vector.extract_strided_slice %20 {offsets = [1, 0], sizes = [1, 128], strides = [1, 1]} : vector<9x128xf32> to vector<1x128xf32>
    %28 = vector.shape_cast %27 : vector<1x128xf32> to vector<1x1x128xf32>
    %29 = vector.broadcast %28 : vector<1x1x128xf32> to vector<8x16x128xf32>
    %30 = arith.mulf %26, %29 : vector<8x16x128xf32>
    %31 = arith.addf %25, %30 : vector<8x16x128xf32>
    %c0_26 = arith.constant 0 : index
    %c2 = arith.constant 2 : index
    %c0_27 = arith.constant 0 : index
    %32 = vector.load %arg8[%c0_26, %c2, %c0_27] : memref<10x18x128xf32, #tpu.memory_space<vmem>>, vector<8x16x128xf32>
    %33 = vector.extract_strided_slice %20 {offsets = [2, 0], sizes = [1, 128], strides = [1, 1]} : vector<9x128xf32> to vector<1x128xf32>
    %34 = vector.shape_cast %33 : vector<1x128xf32> to vector<1x1x128xf32>
    %35 = vector.broadcast %34 : vector<1x1x128xf32> to vector<8x16x128xf32>
    %36 = arith.mulf %32, %35 : vector<8x16x128xf32>
    %37 = arith.addf %31, %36 : vector<8x16x128xf32>
    %c1_28 = arith.constant 1 : index
    %c0_29 = arith.constant 0 : index
    %c0_30 = arith.constant 0 : index
    %38 = vector.load %arg8[%c1_28, %c0_29, %c0_30] : memref<10x18x128xf32, #tpu.memory_space<vmem>>, vector<8x16x128xf32>
    %39 = vector.extract_strided_slice %20 {offsets = [3, 0], sizes = [1, 128], strides = [1, 1]} : vector<9x128xf32> to vector<1x128xf32>
    %40 = vector.shape_cast %39 : vector<1x128xf32> to vector<1x1x128xf32>
    %41 = vector.broadcast %40 : vector<1x1x128xf32> to vector<8x16x128xf32>
    %42 = arith.mulf %38, %41 : vector<8x16x128xf32>
    %43 = arith.addf %37, %42 : vector<8x16x128xf32>
    %c1_31 = arith.constant 1 : index
    %c1_32 = arith.constant 1 : index
    %c0_33 = arith.constant 0 : index
    %44 = vector.load %arg8[%c1_31, %c1_32, %c0_33] : memref<10x18x128xf32, #tpu.memory_space<vmem>>, vector<8x16x128xf32>
    %45 = vector.extract_strided_slice %20 {offsets = [4, 0], sizes = [1, 128], strides = [1, 1]} : vector<9x128xf32> to vector<1x128xf32>
    %46 = vector.shape_cast %45 : vector<1x128xf32> to vector<1x1x128xf32>
    %47 = vector.broadcast %46 : vector<1x1x128xf32> to vector<8x16x128xf32>
    %48 = arith.mulf %44, %47 : vector<8x16x128xf32>
    %49 = arith.addf %43, %48 : vector<8x16x128xf32>
    %c1_34 = arith.constant 1 : index
    %c2_35 = arith.constant 2 : index
    %c0_36 = arith.constant 0 : index
    %50 = vector.load %arg8[%c1_34, %c2_35, %c0_36] : memref<10x18x128xf32, #tpu.memory_space<vmem>>, vector<8x16x128xf32>
    %51 = vector.extract_strided_slice %20 {offsets = [5, 0], sizes = [1, 128], strides = [1, 1]} : vector<9x128xf32> to vector<1x128xf32>
    %52 = vector.shape_cast %51 : vector<1x128xf32> to vector<1x1x128xf32>
    %53 = vector.broadcast %52 : vector<1x1x128xf32> to vector<8x16x128xf32>
    %54 = arith.mulf %50, %53 : vector<8x16x128xf32>
    %55 = arith.addf %49, %54 : vector<8x16x128xf32>
    %c2_37 = arith.constant 2 : index
    %c0_38 = arith.constant 0 : index
    %c0_39 = arith.constant 0 : index
    %56 = vector.load %arg8[%c2_37, %c0_38, %c0_39] : memref<10x18x128xf32, #tpu.memory_space<vmem>>, vector<8x16x128xf32>
    %57 = vector.extract_strided_slice %20 {offsets = [6, 0], sizes = [1, 128], strides = [1, 1]} : vector<9x128xf32> to vector<1x128xf32>
    %58 = vector.shape_cast %57 : vector<1x128xf32> to vector<1x1x128xf32>
    %59 = vector.broadcast %58 : vector<1x1x128xf32> to vector<8x16x128xf32>
    %60 = arith.mulf %56, %59 : vector<8x16x128xf32>
    %61 = arith.addf %55, %60 : vector<8x16x128xf32>
    %c2_40 = arith.constant 2 : index
    %c1_41 = arith.constant 1 : index
    %c0_42 = arith.constant 0 : index
    %62 = vector.load %arg8[%c2_40, %c1_41, %c0_42] : memref<10x18x128xf32, #tpu.memory_space<vmem>>, vector<8x16x128xf32>
    %63 = vector.extract_strided_slice %20 {offsets = [7, 0], sizes = [1, 128], strides = [1, 1]} : vector<9x128xf32> to vector<1x128xf32>
    %64 = vector.shape_cast %63 : vector<1x128xf32> to vector<1x1x128xf32>
    %65 = vector.broadcast %64 : vector<1x1x128xf32> to vector<8x16x128xf32>
    %66 = arith.mulf %62, %65 : vector<8x16x128xf32>
    %67 = arith.addf %61, %66 : vector<8x16x128xf32>
    %c2_43 = arith.constant 2 : index
    %c2_44 = arith.constant 2 : index
    %c0_45 = arith.constant 0 : index
    %68 = vector.load %arg8[%c2_43, %c2_44, %c0_45] : memref<10x18x128xf32, #tpu.memory_space<vmem>>, vector<8x16x128xf32>
    %69 = vector.extract_strided_slice %20 {offsets = [8, 0], sizes = [1, 128], strides = [1, 1]} : vector<9x128xf32> to vector<1x128xf32>
    %70 = vector.shape_cast %69 : vector<1x128xf32> to vector<1x1x128xf32>
    %71 = vector.broadcast %70 : vector<1x1x128xf32> to vector<8x16x128xf32>
    %72 = arith.mulf %68, %71 : vector<8x16x128xf32>
    %73 = arith.addf %67, %72 : vector<8x16x128xf32>
    %74 = arith.truncf %73 : vector<8x16x128xf32> to vector<8x16x128xbf16>
    %c0_46 = arith.constant 0 : index
    %c0_47 = arith.constant 0 : index
    %c0_48 = arith.constant 0 : index
    %c0_49 = arith.constant 0 : index
    %75 = vector.load %arg6[%c0_46, %c0_47, %c0_48, %c0_49] : memref<1x8x16x128xbf16, #tpu.memory_space<vmem>>, vector<1x8x16x128xbf16>
    %76 = vector.shape_cast %75 : vector<1x8x16x128xbf16> to vector<8x16x128xbf16>
    %77 = vector.shape_cast %74 : vector<8x16x128xbf16> to vector<1x8x16x128xbf16>
    tpu.vector_store %arg6[%c0_46, %c0_47, %c0_48, %c0_49], %77 {strides = array<i32>} : memref<1x8x16x128xbf16, #tpu.memory_space<vmem>>, vector<1x8x16x128xbf16>,
    %cst_50 = arith.constant dense<0.000000e+00> : vector<16x128xf32>
    %78 = vector.multi_reduction <add>, %73, %cst_50 [0] : vector<8x16x128xf32> to vector<16x128xf32>
    %cst_51 = arith.constant dense<0.000000e+00> : vector<128xf32>
    %79 = vector.multi_reduction <add>, %78, %cst_51 [0] : vector<16x128xf32> to vector<128xf32>
    %80 = vector.shape_cast %79 : vector<128xf32> to vector<1x128xf32>
    %c0_52 = arith.constant 0 : index
    %c0_53 = arith.constant 0 : index
    %c0_54 = arith.constant 0 : index
    %c0_55 = arith.constant 0 : index
    %81 = vector.load %arg7[%c0_52, %c0_53, %c0_54, %c0_55] : memref<1x1x2x128xf32, #tpu.memory_space<vmem>>, vector<1x1x1x128xf32>
    %82 = vector.shape_cast %81 : vector<1x1x1x128xf32> to vector<1x128xf32>
    %83 = vector.shape_cast %80 : vector<1x128xf32> to vector<1x1x1x128xf32>
    tpu.vector_store %arg7[%c0_52, %c0_53, %c0_54, %c0_55], %83 {strides = array<i32>} : memref<1x1x2x128xf32, #tpu.memory_space<vmem>>, vector<1x1x1x128xf32>,
    %84 = arith.mulf %73, %73 : vector<8x16x128xf32>
    %cst_56 = arith.constant dense<0.000000e+00> : vector<16x128xf32>
    %85 = vector.multi_reduction <add>, %84, %cst_56 [0] : vector<8x16x128xf32> to vector<16x128xf32>
    %cst_57 = arith.constant dense<0.000000e+00> : vector<128xf32>
    %86 = vector.multi_reduction <add>, %85, %cst_57 [0] : vector<16x128xf32> to vector<128xf32>
    %87 = vector.shape_cast %86 : vector<128xf32> to vector<1x128xf32>
    %c0_58 = arith.constant 0 : index
    %c0_59 = arith.constant 0 : index
    %c1_60 = arith.constant 1 : index
    %c0_61 = arith.constant 0 : index
    %88 = vector.load %arg7[%c0_58, %c0_59, %c1_60, %c0_61] : memref<1x1x2x128xf32, #tpu.memory_space<vmem>>, vector<1x1x1x128xf32>
    %89 = vector.shape_cast %88 : vector<1x1x1x128xf32> to vector<1x128xf32>
    %90 = vector.shape_cast %87 : vector<1x128xf32> to vector<1x1x1x128xf32>
    tpu.vector_store %arg7[%c0_58, %c0_59, %c1_60, %c0_61], %90 {strides = array<i32>} : memref<1x1x2x128xf32, #tpu.memory_space<vmem>>, vector<1x1x1x128xf32>,
    return
  }
  func.func @transform_0(%arg0: i32, %arg1: i32) -> (i32, i32, i32, i32) {
    %c0_i32 = arith.constant 0 : i32
    %c0_i32_0 = arith.constant 0 : i32
    %c0_i32_1 = arith.constant 0 : i32
    return %arg0, %arg1, %c0_i32, %c0_i32_0 : i32, i32, i32, i32
  }
  func.func @transform_1(%arg0: i32, %arg1: i32) -> (i32, i32, i32, i32) {
    %c8_i32 = arith.constant 8 : i32
    %0 = arith.muli %arg1, %c8_i32 : i32
    %c1_i32 = arith.constant 1 : i32
    %1 = arith.subi %0, %c1_i32 : i32
    %c0_i32 = arith.constant 0 : i32
    %2 = arith.maxsi %1, %c0_i32 : i32
    %c0_i32_0 = arith.constant 0 : i32
    %c0_i32_1 = arith.constant 0 : i32
    %c0_i32_2 = arith.constant 0 : i32
    return %arg0, %2, %c0_i32_0, %c0_i32_1 : i32, i32, i32, i32
  }
  func.func @transform_2(%arg0: i32, %arg1: i32) -> (i32, i32, i32, i32) {
    %c1_i32 = arith.constant 1 : i32
    %0 = arith.addi %arg1, %c1_i32 : i32
    %c8_i32 = arith.constant 8 : i32
    %1 = arith.muli %0, %c8_i32 : i32
    %c15_i32 = arith.constant 15 : i32
    %2 = arith.minsi %1, %c15_i32 : i32
    %c0_i32 = arith.constant 0 : i32
    %c0_i32_0 = arith.constant 0 : i32
    %c0_i32_1 = arith.constant 0 : i32
    return %arg0, %2, %c0_i32, %c0_i32_0 : i32, i32, i32, i32
  }
  func.func @transform_3(%arg0: i32, %arg1: i32) -> (i32, i32) {
    %c0_i32 = arith.constant 0 : i32
    %c0_i32_0 = arith.constant 0 : i32
    %c0_i32_1 = arith.constant 0 : i32
    return %c0_i32, %c0_i32_0 : i32, i32
  }
  func.func @transform_4(%arg0: i32, %arg1: i32) -> (i32, i32, i32, i32) {
    %c0_i32 = arith.constant 0 : i32
    %c0_i32_0 = arith.constant 0 : i32
    %c0_i32_1 = arith.constant 0 : i32
    return %arg0, %arg1, %c0_i32, %c0_i32_0 : i32, i32, i32, i32
  }
  func.func @transform_5(%arg0: i32, %arg1: i32) -> (i32, i32, i32, i32) {
    %c0_i32 = arith.constant 0 : i32
    %c0_i32_0 = arith.constant 0 : i32
    %c0_i32_1 = arith.constant 0 : i32
    return %arg0, %arg1, %c0_i32, %c0_i32_0 : i32, i32, i32, i32
  }
}

</mosaic_0001>

<llo_original>
// kernel: tpu_custom_call.1
$region0: #{tpu_custom_call.1}
  #allocation0 [shape = 'u32[]', space=smem, size = 0x4, offset = 0x4, fixed_abs, tag = 'smem constant byte address 0x4 - core index']
  #allocation1 [shape = 'u32[144,128]{1,0:T(1,128)}', space=vmem, size = 0x12000, scoped, tag = 'internal scratch']
  #allocation2 [shape = 'f32[10,18,128]{2,1,0:T(8,128)}', space=vmem, size = 0x1e000, scoped, tag = 'scratch operand']
  %s0 = inlined_call_operand.hbm [shape: f32[2,16,16,128], index: 0, kind: input, shape index: {}]
  %s1 = inlined_call_operand.hbm [shape: f32[2,16,16,128], index: 1, kind: input, shape index: {}]
  %s2 = inlined_call_operand.hbm [shape: f32[2,16,16,128], index: 2, kind: input, shape index: {}]
  %s3 = inlined_call_operand.hbm [shape: f32[9,128], index: 3, kind: input, shape index: {}]
  %s4 = inlined_call_operand.hbm [shape: bf16[2,16,16,128], index: 4, kind: output, shape index: {0}]
  %s5 = inlined_call_operand.hbm [shape: f32[2,2,2,128], index: 5, kind: output, shape index: {1}]
  %6 = xla_tuple %s4, %s5
  %s7 = sld [smem:[#allocation0]]
  $region89: #{tpu_custom_call.1} parent=0
    _
  %s9 = ssub.s32 1, %s7
  %s10 = scalar_select 0, %s9, %s7
  $region1: #{tpu_custom_call.1} parent=0
    #allocation3 [shape = 'u8[131072]{0}', space=vmem, size = 0x20000, scoped, tag = 'input window, operand 0']
    #allocation4 [shape = 's32[2]{0}', space=sflag, size = 0x8, scoped, tag = 'scoped memory for tpu_custom_call.1']
    #allocation5 [shape = 's32[2]{0}', space=sflag, size = 0x8, scoped, tag = 'scoped memory for tpu_custom_call.1']
    #allocation6 [shape = 'u8[16384]{0}', space=vmem, size = 0x4000, scoped, tag = 'input window, operand 1']
    #allocation7 [shape = 's32[2]{0}', space=sflag, size = 0x8, scoped, tag = 'scoped memory for tpu_custom_call.1']
    #allocation8 [shape = 'u8[16384]{0}', space=vmem, size = 0x4000, scoped, tag = 'input window, operand 2']
    #allocation9 [shape = 'u8[8192]{0}', space=vmem, size = 0x2000, scoped, tag = 'input window, operand 3, single buffered']
    #allocation10 [shape = 's32[1]{0}', space=sflag, size = 0x4, scoped, tag = 'scoped memory for tpu_custom_call.1']
    #allocation11 [shape = 'u8[65536]{0}', space=vmem, size = 0x10000, scoped, tag = 'output window, operand 0']
    #allocation12 [shape = 'u8[2048]{0}', space=vmem, size = 0x800, scoped, tag = 'output window, operand 1']
    #allocation13 [shape = 's32[2]{0}', space=sflag, size = 0x8, scoped, tag = 'scoped memory for tpu_custom_call.1']
    %11 = vsyncpa [#allocation4], 0
    %s12 = scalar_lea.sflag [#allocation4], 1
    %13 = vsyncpa %s12, 0
    %14 = vsyncpa [#allocation7], 0
    %s15 = scalar_lea.sflag [#allocation7], 1
    %16 = vsyncpa %s15, 0
    %17 = vsyncpa [#allocation10], 0
    %18 = vsyncpa [#allocation5], 0
    %s19 = scalar_lea.sflag [#allocation5], 1
    %20 = vsyncpa %s19, 0
    %21 = vsyncpa [#allocation13], 0
    %s22 = scalar_lea.sflag [#allocation13], 1
    %23 = vsyncpa %s22, 0
    loop: start=0, step=1, limit=6
    $region2: #{tpu_custom_call.1} parent=1 // loop_pre_header
      _
    $region3: #{tpu_custom_call.1} parent=1 // loop_header
      %s25 = sphi 0, %s29
      %p26 = scmp.ge.s32.totalorder %s25, 6
      %s32 = sphi 0, %s44
      %s33 = sphi 0, %s40
      %s34 = sphi 0, %s32
      %s35 = sphi 0, %s33
      %s36 = sphi 0, %s34
      %s37 = sphi 0, %s35
      %s49 = sphi 0, %s51
      %s52 = sphi 0, %s49
      %s53 = sphi 0, %s52
      %s69 = sphi 0, %s53
      %s85 = sphi 0, %s87
      %s88 = sphi 0, %s85
      %s89 = sphi 0, %s88
      %s105 = sphi 0, %s89
      %s121 = sphi 0, %s123
      %s124 = sphi 0, %s121
      %s125 = sphi 0, %s124
      %s141 = sphi 0, %s125
      %s145 = sphi 0, %s145
      %s147 = sphi 0, %s145
      %s148 = sphi 0, %s147
      %s162 = sphi 0, %s148
      %s170 = sphi 0, %s172
      %s173 = sphi 0, %s170
      %s174 = sphi 0, %s173
      %s190 = sphi 0, %s174
      %s198 = sphi 0, %s200
      %s201 = sphi 0, %s198
      %s202 = sphi 0, %s201
      %s218 = sphi 0, %s202
    $region4: #{tpu_custom_call.1} parent=1 // loop_header_branch
      %28 = sbr.rel (%p26) target = $region8
    $region5: #{tpu_custom_call.1} parent=1 // loop_body
      %s30 = ssub.s32 %s25, 1
      %s31 = ssub.s32 %s25, 2
      %s38 = sadd.s32 1, %s33
      %p39 = scmp.ge.s32.totalorder %s38, 2
      %s40 = scalar_select %p39, 0, %s38
      %s41 = sadd.s32 1, %s32
      %s42 = scalar_select %p39, %s41, %s32
      %p43 = scmp.ge.s32.totalorder %s42, 2
      %s44 = scalar_select %p43, 0, %s42
      %s45 = ssub.s32 %s32, %s44
      %s46 = ssub.s32 %s33, %s40
      %s47 = sor.u32 %s45, %s46
      %p48 = scmp.eq.s32.totalorder %s47, 0
      %s50 = sadd.s32 %s49, 1
      %s51 = scalar_select %p48, %s49, %s50
      %p54 = pneg %p48
      %p55 = scmp.eq.s32.totalorder %s25, 3
      %p56 = por %p54, %p55
      %p57 = scmp.ne.s32.totalorder %s49, %s52
      %p58 = scmp.eq.s32.totalorder %s25, 0
      %p59 = por %p57, %p58
      %p60 = scmp.ne.s32.totalorder %s49, %s52
      %p61 = scmp.eq.s32.totalorder %s30, 3
      %p62 = por %p60, %p61
      %p63 = scmp.ne.s32.totalorder %s52, %s53
      %p64 = scmp.eq.s32.totalorder %s30, 0
      %p65 = por %p63, %p64
      %p66 = scmp.ne.s32.totalorder %s52, %s53
      %p67 = scmp.eq.s32.totalorder %s31, 3
      %p68 = por %p66, %p67
      %p70 = scmp.ne.s32.totalorder %s53, %s69
      %p71 = scmp.eq.s32.totalorder %s31, 0
      %p72 = por %p70, %p71
      %s73 = smul.u32 %s33, 8
      %s74 = ssub.s32 %s73, 1
      %p75 = scmp.gt.s32.totalorder %s74, 0
      %s76 = scalar_select %p75, %s74, 0
      %s77 = smul.u32 %s40, 8
      %s78 = ssub.s32 %s77, 1
      %p79 = scmp.gt.s32.totalorder %s78, 0
      %s80 = scalar_select %p79, %s78, 0
      %s81 = ssub.s32 %s32, %s44
      %s82 = ssub.s32 %s76, %s80
      %s83 = sor.u32 %s81, %s82
      %p84 = scmp.eq.s32.totalorder %s83, 0
      %s86 = sadd.s32 %s85, 1
      %s87 = scalar_select %p84, %s85, %s86
      %p90 = pneg %p84
      %p91 = scmp.eq.s32.totalorder %s25, 3
      %p92 = por %p90, %p91
      %p93 = scmp.ne.s32.totalorder %s85, %s88
      %p94 = scmp.eq.s32.totalorder %s25, 0
      %p95 = por %p93, %p94
      %p96 = scmp.ne.s32.totalorder %s85, %s88
      %p97 = scmp.eq.s32.totalorder %s30, 3
      %p98 = por %p96, %p97
      %p99 = scmp.ne.s32.totalorder %s88, %s89
      %p100 = scmp.eq.s32.totalorder %s30, 0
      %p101 = por %p99, %p100
      %p102 = scmp.ne.s32.totalorder %s88, %s89
      %p103 = scmp.eq.s32.totalorder %s31, 3
      %p104 = por %p102, %p103
      %p106 = scmp.ne.s32.totalorder %s89, %s105
      %p107 = scmp.eq.s32.totalorder %s31, 0
      %p108 = por %p106, %p107
      %s109 = sadd.s32 %s33, 1
      %s110 = smul.u32 %s109, 8
      %p111 = scmp.lt.s32.totalorder %s110, 15
      %s112 = scalar_select %p111, %s110, 15
      %s113 = sadd.s32 %s40, 1
      %s114 = smul.u32 %s113, 8
      %p115 = scmp.lt.s32.totalorder %s114, 15
      %s116 = scalar_select %p115, %s114, 15
      %s117 = ssub.s32 %s32, %s44
      %s118 = ssub.s32 %s112, %s116
      %s119 = sor.u32 %s117, %s118
      %p120 = scmp.eq.s32.totalorder %s119, 0
      %s122 = sadd.s32 %s121, 1
      %s123 = scalar_select %p120, %s121, %s122
      %p126 = pneg %p120
      %p127 = scmp.eq.s32.totalorder %s25, 3
      %p128 = por %p126, %p127
      %p129 = scmp.ne.s32.totalorder %s121, %s124
      %p130 = scmp.eq.s32.totalorder %s25, 0
      %p131 = por %p129, %p130
      %p132 = scmp.ne.s32.totalorder %s121, %s124
      %p133 = scmp.eq.s32.totalorder %s30, 3
      %p134 = por %p132, %p133
      %p135 = scmp.ne.s32.totalorder %s124, %s125
      %p136 = scmp.eq.s32.totalorder %s30, 0
      %p137 = por %p135, %p136
      %p138 = scmp.ne.s32.totalorder %s124, %s125
      %p139 = scmp.eq.s32.totalorder %s31, 3
      %p140 = por %p138, %p139
      %p142 = scmp.ne.s32.totalorder %s125, %s141
      %p143 = scmp.eq.s32.totalorder %s31, 0
      %p144 = por %p142, %p143
      %s146 = sadd.s32 %s145, 1
      %p149 = scmp.eq.s32.totalorder %s25, 3
      %p150 = scmp.ne.s32.totalorder %s145, %s147
      %p151 = scmp.eq.s32.totalorder %s25, 0
      %p152 = por %p150, %p151
      %p153 = scmp.ne.s32.totalorder %s145, %s147
      %p154 = scmp.eq.s32.totalorder %s30, 3
      %p155 = por %p153, %p154
      %p156 = scmp.ne.s32.totalorder %s147, %s148
      %p157 = scmp.eq.s32.totalorder %s30, 0
      %p158 = por %p156, %p157
      %p159 = scmp.ne.s32.totalorder %s147, %s148
      %p160 = scmp.eq.s32.totalorder %s31, 3
      %p161 = por %p159, %p160
      %p163 = scmp.ne.s32.totalorder %s148, %s162
      %p164 = scmp.eq.s32.totalorder %s31, 0
      %p165 = por %p163, %p164
      %s166 = ssub.s32 %s32, %s44
      %s167 = ssub.s32 %s33, %s40
      %s168 = sor.u32 %s166, %s167
      %p169 = scmp.eq.s32.totalorder %s168, 0
      %s171 = sadd.s32 %s170, 1
      %s172 = scalar_select %p169, %s170, %s171
      %p175 = pneg %p169
      %p176 = scmp.eq.s32.totalorder %s25, 3
      %p177 = por %p175, %p176
      %p178 = scmp.ne.s32.totalorder %s170, %s173
      %p179 = scmp.eq.s32.totalorder %s25, 0
      %p180 = por %p178, %p179
      %p181 = scmp.ne.s32.totalorder %s170, %s173
      %p182 = scmp.eq.s32.totalorder %s30, 3
      %p183 = por %p181, %p182
      %p184 = scmp.ne.s32.totalorder %s173, %s174
      %p185 = scmp.eq.s32.totalorder %s30, 0
      %p186 = por %p184, %p185
      %p187 = scmp.ne.s32.totalorder %s173, %s174
      %p188 = scmp.eq.s32.totalorder %s31, 3
      %p189 = por %p187, %p188
      %p191 = scmp.ne.s32.totalorder %s174, %s190
      %p192 = scmp.eq.s32.totalorder %s31, 0
      %p193 = por %p191, %p192
      %s194 = ssub.s32 %s32, %s44
      %s195 = ssub.s32 %s33, %s40
      %s196 = sor.u32 %s194, %s195
      %p197 = scmp.eq.s32.totalorder %s196, 0
      %s199 = sadd.s32 %s198, 1
      %s200 = scalar_select %p197, %s198, %s199
      %p203 = pneg %p197
      %p204 = scmp.eq.s32.totalorder %s25, 3
      %p205 = por %p203, %p204
      %p206 = scmp.ne.s32.totalorder %s198, %s201
      %p207 = scmp.eq.s32.totalorder %s25, 0
      %p208 = por %p206, %p207
      %p209 = scmp.ne.s32.totalorder %s198, %s201
      %p210 = scmp.eq.s32.totalorder %s30, 3
      %p211 = por %p209, %p210
      %p212 = scmp.ne.s32.totalorder %s201, %s202
      %p213 = scmp.eq.s32.totalorder %s30, 0
      %p214 = por %p212, %p213
      %p215 = scmp.ne.s32.totalorder %s201, %s202
      %p216 = scmp.eq.s32.totalorder %s31, 3
      %p217 = por %p215, %p216
      %p219 = scmp.ne.s32.totalorder %s202, %s218
      %p220 = scmp.eq.s32.totalorder %s31, 0
      %p221 = por %p219, %p220
      %p222 = scmp.le.s32.totalorder 1, %s25
      %p223 = scmp.lt.s32.totalorder %s25, 5
      %p224 = pnand %p222, %p223
      %p225 = pneg %p224
      // Predicated region
      $region9: #{tpu_custom_call.1} parent=5 // pred_check
        _
      $region10: #{tpu_custom_call.1} parent=5 // pred_check_branch
        %227 = sbr.rel (%p224) target = $region12
      $region11: #{tpu_custom_call.1} parent=5 // pred_region
        %s228 = ssub.s32 %s25, 1
        // Predicated region
        $region13: #{tpu_custom_call.1} parent=11 // pred_check
          %p229 = pneg %p158
        $region14: #{tpu_custom_call.1} parent=11 // pred_check_branch
          %231 = sbr.rel (%p229) target = $region16
        $region15: #{tpu_custom_call.1} parent=11 // pred_region
          %s233 = ssub.s32 256, 256
          %234 = vsyncadd [#allocation10], %s233
          %s235 = sshll.u32 [#allocation9], 4
          %s236 = int_to_ptr.vmem [resolvable:$true] %s235
          %241 = dma.hbm_to_vmem [thread:$0]  %s3, 256, %s236, [#allocation10], 128, 128, 8
        $region16: #{tpu_custom_call.1} parent=11 // pred_fallthru
          _
      $region12: #{tpu_custom_call.1} parent=5 // pred_fallthru
        _
      %p242 = scmp.lt.s32.totalorder %s25, 4
      // Predicated region
      $region17: #{tpu_custom_call.1} parent=5 // pred_check
        %p243 = pneg %p242
      $region18: #{tpu_custom_call.1} parent=5 // pred_check_branch
        %245 = sbr.rel (%p243) target = $region20
      $region19: #{tpu_custom_call.1} parent=5 // pred_region
        // Predicated region
        $region21: #{tpu_custom_call.1} parent=19 // pred_check
          %p246 = pneg %p59
        $region22: #{tpu_custom_call.1} parent=19 // pred_check_branch
          %248 = sbr.rel (%p246) target = $region24
        $region23: #{tpu_custom_call.1} parent=19 // pred_region
          %s249 = sand.u32 %s49, 1
          %s250 = scalar_lea.sflag [#allocation4], %s249
          %s251 = sand.u32 %s49, 1
          %s252 = smul.addr %s251, 128
          %s253 = scalar_lea.vmem [#allocation3], %s252
          %s254 = smul.u32 8, %s33
          %s256 = ssub.s32 2048, 2048
          %257 = vsyncadd %s250, %s256
          %s258 = smul.addr %s254, 2
          %s259 = smul.addr %s32, 32
          %s260 = sadd.s32 %s258, %s259
          %s261 = smul.addr %s260, 128
          %s262 = scalar_lea.hbm %s0, %s261
          %s263 = sshll.u32 %s253, 4
          %s264 = int_to_ptr.vmem [resolvable:$true] %s263
          %269 = dma.hbm_to_vmem [thread:$0]  %s262, 2048, %s264, %s250, 128, 128, 8
        $region24: #{tpu_custom_call.1} parent=19 // pred_fallthru
          _
        // Predicated region
        $region25: #{tpu_custom_call.1} parent=19 // pred_check
          %p270 = pneg %p95
        $region26: #{tpu_custom_call.1} parent=19 // pred_check_branch
          %272 = sbr.rel (%p270) target = $region28
        $region27: #{tpu_custom_call.1} parent=19 // pred_region
          %s273 = sand.u32 %s25, 1
          %s274 = scalar_lea.sflag [#allocation7], %s273
          %s275 = sand.u32 %s85, 1
          %s276 = smul.addr %s275, 16
          %s277 = scalar_lea.vmem [#allocation6], %s276
          %s278 = smul.u32 %s33, 8
          %s279 = ssub.s32 %s278, 1
          %p280 = scmp.gt.s32.totalorder %s279, 0
          %s281 = scalar_select %p280, %s279, 0
          %s283 = ssub.s32 256, 256
          %284 = vsyncadd %s274, %s283
          %s285 = smul.addr %s281, 2
          %s286 = smul.addr %s32, 32
          %s287 = sadd.s32 %s285, %s286
          %s288 = smul.addr %s287, 128
          %s289 = scalar_lea.hbm %s1, %s288
          %s290 = sshll.u32 %s277, 4
          %s291 = int_to_ptr.vmem [resolvable:$true] %s290
          %296 = dma.hbm_to_vmem [thread:$0]  %s289, 256, %s291, %s274, 128, 128, 8
        $region28: #{tpu_custom_call.1} parent=19 // pred_fallthru
          _
        // Predicated region
        $region29: #{tpu_custom_call.1} parent=19 // pred_check
          %p297 = pneg %p131
        $region30: #{tpu_custom_call.1} parent=19 // pred_check_branch
          %299 = sbr.rel (%p297) target = $region32
        $region31: #{tpu_custom_call.1} parent=19 // pred_region
          %s300 = sand.u32 %s25, 1
          %s301 = scalar_lea.sflag [#allocation7], %s300
          %s302 = sand.u32 %s121, 1
          %s303 = smul.addr %s302, 16
          %s304 = scalar_lea.vmem [#allocation8], %s303
          %s305 = sadd.s32 %s33, 1
          %s306 = smul.u32 %s305, 8
          %p307 = scmp.lt.s32.totalorder %s306, 15
          %s308 = scalar_select %p307, %s306, 15
          %s310 = ssub.s32 256, 256
          %311 = vsyncadd %s301, %s310
          %s312 = smul.addr %s308, 2
          %s313 = smul.addr %s32, 32
          %s314 = sadd.s32 %s312, %s313
          %s315 = smul.addr %s314, 128
          %s316 = scalar_lea.hbm %s2, %s315
          %s317 = sshll.u32 %s304, 4
          %s318 = int_to_ptr.vmem [resolvable:$true] %s317
          %323 = dma.hbm_to_vmem [thread:$0]  %s316, 256, %s318, %s301, 128, 128, 8
        $region32: #{tpu_custom_call.1} parent=19 // pred_fallthru
          _
      $region20: #{tpu_custom_call.1} parent=5 // pred_fallthru
        _
      %p324 = scmp.le.s32.totalorder 1, %s25
      %p325 = scmp.lt.s32.totalorder %s25, 5
      %p326 = pnand %p324, %p325
      %p327 = pneg %p326
      // Predicated region
      $region33: #{tpu_custom_call.1} parent=5 // pred_check
        _
      $region34: #{tpu_custom_call.1} parent=5 // pred_check_branch
        %329 = sbr.rel (%p326) target = $region36
      $region35: #{tpu_custom_call.1} parent=5 // pred_region
        %s330 = ssub.s32 %s25, 1
        %s331 = sand.u32 %s52, 1
        %s332 = scalar_lea.sflag [#allocation4], %s331
        %s333 = sand.u32 %s52, 1
        %s334 = smul.addr %s333, 128
        %s335 = scalar_lea.vmem [#allocation3], %s334
        // Predicated region
        $region37: #{tpu_custom_call.1} parent=35 // pred_check
          %p336 = pneg %p65
        $region38: #{tpu_custom_call.1} parent=35 // pred_check_branch
          %338 = sbr.rel (%p336) target = $region40
        $region39: #{tpu_custom_call.1} parent=35 // pred_region
          %339 = dma.done %s332, 2048
        $region40: #{tpu_custom_call.1} parent=35 // pred_fallthru
          _
        %s340 = sand.u32 %s30, 1
        %s341 = scalar_lea.sflag [#allocation7], %s340
        %s342 = sand.u32 %s88, 1
        %s343 = smul.addr %s342, 16
        %s344 = scalar_lea.vmem [#allocation6], %s343
        // Predicated region
        $region41: #{tpu_custom_call.1} parent=35 // pred_check
          %p345 = pneg %p101
        $region42: #{tpu_custom_call.1} parent=35 // pred_check_branch
          %347 = sbr.rel (%p345) target = $region44
        $region43: #{tpu_custom_call.1} parent=35 // pred_region
          %348 = dma.done %s341, 256
        $region44: #{tpu_custom_call.1} parent=35 // pred_fallthru
          _
        %s349 = sand.u32 %s30, 1
        %s350 = scalar_lea.sflag [#allocation7], %s349
        %s351 = sand.u32 %s124, 1
        %s352 = smul.addr %s351, 16
        %s353 = scalar_lea.vmem [#allocation8], %s352
        // Predicated region
        $region45: #{tpu_custom_call.1} parent=35 // pred_check
          %p354 = pneg %p137
        $region46: #{tpu_custom_call.1} parent=35 // pred_check_branch
          %356 = sbr.rel (%p354) target = $region48
        $region47: #{tpu_custom_call.1} parent=35 // pred_region
          %357 = dma.done %s350, 256
        $region48: #{tpu_custom_call.1} parent=35 // pred_fallthru
          _
        // Predicated region
        $region49: #{tpu_custom_call.1} parent=35 // pred_check
          %p358 = pneg %p158
        $region50: #{tpu_custom_call.1} parent=35 // pred_check_branch
          %360 = sbr.rel (%p358) target = $region52
        $region51: #{tpu_custom_call.1} parent=35 // pred_region
          %361 = dma.done [#allocation10], 256
        $region52: #{tpu_custom_call.1} parent=35 // pred_fallthru
          _
        %s362 = sand.u32 %s52, 1
        %s363 = scalar_lea.sflag [#allocation4], %s362
        %s364 = sand.u32 %s52, 1
        %s365 = smul.addr %s364, 128
        %s366 = scalar_lea.vmem [#allocation3], %s365
        %p367 = pneg %p65
        %p368 = pneg %p62
        %s369 = sand.u32 %s30, 1
        %s370 = scalar_lea.sflag [#allocation7], %s369
        %s371 = sand.u32 %s88, 1
        %s372 = smul.addr %s371, 16
        %s373 = scalar_lea.vmem [#allocation6], %s372
        %p374 = pneg %p101
        %p375 = pneg %p98
        %s376 = sand.u32 %s30, 1
        %s377 = scalar_lea.sflag [#allocation7], %s376
        %s378 = sand.u32 %s124, 1
        %s379 = smul.addr %s378, 16
        %s380 = scalar_lea.vmem [#allocation8], %s379
        %p381 = pneg %p137
        %p382 = pneg %p134
        %p383 = pneg %p158
        %p384 = pneg %p155
        %p385 = pneg %p186
        %p386 = pneg %p183
        %s387 = sand.u32 %s173, 1
        %s388 = scalar_lea.sflag [#allocation5], %s387
        %s389 = sand.u32 %s173, 1
        %s390 = smul.addr %s389, 64
        %s391 = scalar_lea.vmem [#allocation11], %s390
        %p392 = pneg %p214
        %p393 = pneg %p211
        %s394 = sand.u32 %s201, 1
        %s395 = scalar_lea.sflag [#allocation13], %s394
        %s396 = sand.u32 %s201, 1
        %s397 = smul.addr %s396, 2
        %s398 = scalar_lea.vmem [#allocation12], %s397
        %s399 = smul.u32 8, %s35
        %s400 = smul.u32 %s35, 8
        %s401 = ssub.s32 %s400, 1
        %p402 = scmp.gt.s32.totalorder %s401, 0
        %s403 = scalar_select %p402, %s401, 0
        %s404 = sadd.s32 %s35, 1
        %s405 = smul.u32 %s404, 8
        %p406 = scmp.lt.s32.totalorder %s405, 15
        %s407 = scalar_select %p406, %s405, 15
        %s408 = smul.u32 8, %s35
        %409 = vst [vmem:[#allocation2] sm:$0x1] 0.0
        %410 = vst [vmem:[#allocation2 + $0x18] sm:$0x1] 0.0
        %411 = vst [vmem:[#allocation2 + $0x30] sm:$0x1] 0.0
        %412 = vst [vmem:[#allocation2 + $0x48] sm:$0x1] 0.0
        %413 = vst [vmem:[#allocation2 + $0x60] sm:$0x1] 0.0
        %414 = vst [vmem:[#allocation2 + $0x78] sm:$0x1] 0.0
        %415 = vst [vmem:[#allocation2 + $0x90] sm:$0x1] 0.0
        %416 = vst [vmem:[#allocation2 + $0xa8] sm:$0x1] 0.0
        %417 = vst [vmem:[#allocation2 + $0xc0] sm:$0x1] 0.0
        %418 = vst [vmem:[#allocation2 + $0xd8] sm:$0x1] 0.0
        %419 = vst [vmem:[#allocation2 + $0x11] sm:$0x1] 0.0
        %420 = vst [vmem:[#allocation2 + $0x29] sm:$0x1] 0.0
        %421 = vst [vmem:[#allocation2 + $0x41] sm:$0x1] 0.0
        %422 = vst [vmem:[#allocation2 + $0x59] sm:$0x1] 0.0
        %423 = vst [vmem:[#allocation2 + $0x71] sm:$0x1] 0.0
        %424 = vst [vmem:[#allocation2 + $0x89] sm:$0x1] 0.0
        %425 = vst [vmem:[#allocation2 + $0xa1] sm:$0x1] 0.0
        %426 = vst [vmem:[#allocation2 + $0xb9] sm:$0x1] 0.0
        %427 = vst [vmem:[#allocation2 + $0xd1] sm:$0x1] 0.0
        %428 = vst [vmem:[#allocation2 + $0xe9] sm:$0x1] 0.0
        %v429 = vld [vmem:[%s335] sm:$0xff]
        %v430 = vld [vmem:[%s335 + $0x8] sm:$0xff]
        %v431 = vld [vmem:[%s335 + $0x10] sm:$0xff]
        %v432 = vld [vmem:[%s335 + $0x18] sm:$0xff]
        %v433 = vld [vmem:[%s335 + $0x20] sm:$0xff]
        %v434 = vld [vmem:[%s335 + $0x28] sm:$0xff]
        %v435 = vld [vmem:[%s335 + $0x30] sm:$0xff]
        %v436 = vld [vmem:[%s335 + $0x38] sm:$0xff]
        %v437 = vld [vmem:[%s335 + $0x40] sm:$0xff]
        %v438 = vld [vmem:[%s335 + $0x48] sm:$0xff]
        %v439 = vld [vmem:[%s335 + $0x50] sm:$0xff]
        %v440 = vld [vmem:[%s335 + $0x58] sm:$0xff]
        %v441 = vld [vmem:[%s335 + $0x60] sm:$0xff]
        %v442 = vld [vmem:[%s335 + $0x68] sm:$0xff]
        %v443 = vld [vmem:[%s335 + $0x70] sm:$0xff]
        %v444 = vld [vmem:[%s335 + $0x78] sm:$0xff]
        %s445 = scalar_lea.vmem [#allocation2], 24
        %446 = vst [vmem:[%s445 + $0x1] sm:$0xff] %v429
        %447 = vst [vmem:[%s445 + $0x9] sm:$0xff] %v430
        %448 = vst [vmem:[%s445 + $0x19] sm:$0xff] %v431
        %449 = vst [vmem:[%s445 + $0x21] sm:$0xff] %v432
        %450 = vst [vmem:[%s445 + $0x31] sm:$0xff] %v433
        %451 = vst [vmem:[%s445 + $0x39] sm:$0xff] %v434
        %452 = vst [vmem:[%s445 + $0x49] sm:$0xff] %v435
        %453 = vst [vmem:[%s445 + $0x51] sm:$0xff] %v436
        %454 = vst [vmem:[%s445 + $0x61] sm:$0xff] %v437
        %455 = vst [vmem:[%s445 + $0x69] sm:$0xff] %v438
        %456 = vst [vmem:[%s445 + $0x79] sm:$0xff] %v439
        %457 = vst [vmem:[%s445 + $0x81] sm:$0xff] %v440
        %458 = vst [vmem:[%s445 + $0x91] sm:$0xff] %v441
        %459 = vst [vmem:[%s445 + $0x99] sm:$0xff] %v442
        %460 = vst [vmem:[%s445 + $0xa9] sm:$0xff] %v443
        %461 = vst [vmem:[%s445 + $0xb1] sm:$0xff] %v444
        %p462 = scmp.eq.s32.totalorder %s35, 0
        // Predicated region
        $region53: #{tpu_custom_call.1} parent=35 // pred_check
          %p463 = pneg %p462
        $region54: #{tpu_custom_call.1} parent=35 // pred_check_branch
          %465 = sbr.rel (%p463) target = $region56
        $region55: #{tpu_custom_call.1} parent=35 // pred_region
          %466 = vst [vmem:[#allocation2 + $0x1] sm:$0xff] 0.0
          %467 = vst [vmem:[#allocation2 + $0x9] sm:$0xff] 0.0
        $region56: #{tpu_custom_call.1} parent=35 // pred_fallthru
          _
        %p468 = scmp.gt.s32.totalorder %s35, 0
        // Predicated region
        $region57: #{tpu_custom_call.1} parent=35 // pred_check
          %p469 = pneg %p468
        $region58: #{tpu_custom_call.1} parent=35 // pred_check_branch
          %471 = sbr.rel (%p469) target = $region60
        $region59: #{tpu_custom_call.1} parent=35 // pred_region
          %v472 = vld [vmem:[%s344] sm:$0xff]
          %v473 = vld [vmem:[%s344 + $0x8] sm:$0xff]
          %474 = vst [vmem:[#allocation2 + $0x1] sm:$0xff] %v472
          %475 = vst [vmem:[#allocation2 + $0x9] sm:$0xff] %v473
        $region60: #{tpu_custom_call.1} parent=35 // pred_fallthru
          _
        %p476 = scmp.eq.s32.totalorder %s35, 1
        // Predicated region
        $region61: #{tpu_custom_call.1} parent=35 // pred_check
          %p477 = pneg %p476
        $region62: #{tpu_custom_call.1} parent=35 // pred_check_branch
          %479 = sbr.rel (%p477) target = $region64
        $region63: #{tpu_custom_call.1} parent=35 // pred_region
          %s480 = scalar_lea.vmem [#allocation2], 216
          %481 = vst [vmem:[%s480 + $0x1] sm:$0xff] 0.0
          %482 = vst [vmem:[%s480 + $0x9] sm:$0xff] 0.0
        $region64: #{tpu_custom_call.1} parent=35 // pred_fallthru
          _
        %p483 = scmp.lt.s32.totalorder %s35, 1
        // Predicated region
        $region65: #{tpu_custom_call.1} parent=35 // pred_check
          %p484 = pneg %p483
        $region66: #{tpu_custom_call.1} parent=35 // pred_check_branch
          %486 = sbr.rel (%p484) target = $region68
        $region67: #{tpu_custom_call.1} parent=35 // pred_region
          %v487 = vld [vmem:[%s353] sm:$0xff]
          %v488 = vld [vmem:[%s353 + $0x8] sm:$0xff]
          %s489 = scalar_lea.vmem [#allocation2], 216
          %490 = vst [vmem:[%s489 + $0x1] sm:$0xff] %v487
          %491 = vst [vmem:[%s489 + $0x9] sm:$0xff] %v488
        $region68: #{tpu_custom_call.1} parent=35 // pred_fallthru
          _
        %v492 = vld [vmem:[#allocation9] sm:$0xff]
        %v493 = vld [vmem:[#allocation9 + $0x8] sm:$0x1]
        %v494 = vld [vmem:[#allocation2] sm:$0xff]
        %v495 = vld [vmem:[#allocation2 + $0x8] sm:$0xff]
        %v496 = vld [vmem:[#allocation2 + $0x18] sm:$0xff]
        %v497 = vld [vmem:[#allocation2 + $0x20] sm:$0xff]
        %v498 = vld [vmem:[#allocation2 + $0x30] sm:$0xff]
        %v499 = vld [vmem:[#allocation2 + $0x38] sm:$0xff]
        %v500 = vld [vmem:[#allocation2 + $0x48] sm:$0xff]
        %v501 = vld [vmem:[#allocation2 + $0x50] sm:$0xff]
        %v502 = vld [vmem:[#allocation2 + $0x60] sm:$0xff]
        %v503 = vld [vmem:[#allocation2 + $0x68] sm:$0xff]
        %v504 = vld [vmem:[#allocation2 + $0x78] sm:$0xff]
        %v505 = vld [vmem:[#allocation2 + $0x80] sm:$0xff]
        %v506 = vld [vmem:[#allocation2 + $0x90] sm:$0xff]
        %v507 = vld [vmem:[#allocation2 + $0x98] sm:$0xff]
        %v508 = vld [vmem:[#allocation2 + $0xa8] sm:$0xff]
        %v509 = vld [vmem:[#allocation2 + $0xb0] sm:$0xff]
        %v510 = vlaneseq
        %v511 = vshrl.u32 %v510, 7
        %v512 = vsub.s32 0, %v511
        %v513 = vrot.slane %v492, %v512
        %v514 = vmul.f32 %v494, %v513
        %v515 = vmul.f32 %v495, %v513
        %v516 = vmul.f32 %v496, %v513
        %v517 = vmul.f32 %v497, %v513
        %v518 = vmul.f32 %v498, %v513
        %v519 = vmul.f32 %v499, %v513
        %v520 = vmul.f32 %v500, %v513
        %v521 = vmul.f32 %v501, %v513
        %v522 = vmul.f32 %v502, %v513
        %v523 = vmul.f32 %v503, %v513
        %v524 = vmul.f32 %v504, %v513
        %v525 = vmul.f32 %v505, %v513
        %v526 = vmul.f32 %v506, %v513
        %v527 = vmul.f32 %v507, %v513
        %v528 = vmul.f32 %v508, %v513
        %v529 = vmul.f32 %v509, %v513
        %v530 = vld [vmem:[#allocation2 + $0x1] sm:$0xff]
        %v531 = vld [vmem:[#allocation2 + $0x9] sm:$0xff]
        %v532 = vld [vmem:[#allocation2 + $0x19] sm:$0xff]
        %v533 = vld [vmem:[#allocation2 + $0x21] sm:$0xff]
        %v534 = vld [vmem:[#allocation2 + $0x31] sm:$0xff]
        %v535 = vld [vmem:[#allocation2 + $0x39] sm:$0xff]
        %v536 = vld [vmem:[#allocation2 + $0x49] sm:$0xff]
        %v537 = vld [vmem:[#allocation2 + $0x51] sm:$0xff]
        %v538 = vld [vmem:[#allocation2 + $0x61] sm:$0xff]
        %v539 = vld [vmem:[#allocation2 + $0x69] sm:$0xff]
        %v540 = vld [vmem:[#allocation2 + $0x79] sm:$0xff]
        %v541 = vld [vmem:[#allocation2 + $0x81] sm:$0xff]
        %v542 = vld [vmem:[#allocation2 + $0x91] sm:$0xff]
        %v543 = vld [vmem:[#allocation2 + $0x99] sm:$0xff]
        %v544 = vld [vmem:[#allocation2 + $0xa9] sm:$0xff]
        %v545 = vld [vmem:[#allocation2 + $0xb1] sm:$0xff]
        %v546 = vlaneseq
        %v547 = vshrl.u32 %v546, 7
        %v548 = vsub.s32 1, %v547
        %v549 = vrot.slane %v492, %v548
        %v550 = vmul.f32 %v530, %v549
        %v551 = vmul.f32 %v531, %v549
        %v552 = vmul.f32 %v532, %v549
        %v553 = vmul.f32 %v533, %v549
        %v554 = vmul.f32 %v534, %v549
        %v555 = vmul.f32 %v535, %v549
        %v556 = vmul.f32 %v536, %v549
        %v557 = vmul.f32 %v537, %v549
        %v558 = vmul.f32 %v538, %v549
        %v559 = vmul.f32 %v539, %v549
        %v560 = vmul.f32 %v540, %v549
        %v561 = vmul.f32 %v541, %v549
        %v562 = vmul.f32 %v542, %v549
        %v563 = vmul.f32 %v543, %v549
        %v564 = vmul.f32 %v544, %v549
        %v565 = vmul.f32 %v545, %v549
        %v566 = vadd.f32 %v514, %v550
        %v567 = vadd.f32 %v515, %v551
        %v568 = vadd.f32 %v516, %v552
        %v569 = vadd.f32 %v517, %v553
        %v570 = vadd.f32 %v518, %v554
        %v571 = vadd.f32 %v519, %v555
        %v572 = vadd.f32 %v520, %v556
        %v573 = vadd.f32 %v521, %v557
        %v574 = vadd.f32 %v522, %v558
        %v575 = vadd.f32 %v523, %v559
        %v576 = vadd.f32 %v524, %v560
        %v577 = vadd.f32 %v525, %v561
        %v578 = vadd.f32 %v526, %v562
        %v579 = vadd.f32 %v527, %v563
        %v580 = vadd.f32 %v528, %v564
        %v581 = vadd.f32 %v529, %v565
        %v582 = vld [vmem:[#allocation2 + $0x2] sm:$0xff]
        %v583 = vld [vmem:[#allocation2 + $0xa] sm:$0xff]
        %v584 = vld [vmem:[#allocation2 + $0x1a] sm:$0xff]
        %v585 = vld [vmem:[#allocation2 + $0x22] sm:$0xff]
        %v586 = vld [vmem:[#allocation2 + $0x32] sm:$0xff]
        %v587 = vld [vmem:[#allocation2 + $0x3a] sm:$0xff]
        %v588 = vld [vmem:[#allocation2 + $0x4a] sm:$0xff]
        %v589 = vld [vmem:[#allocation2 + $0x52] sm:$0xff]
        %v590 = vld [vmem:[#allocation2 + $0x62] sm:$0xff]
        %v591 = vld [vmem:[#allocation2 + $0x6a] sm:$0xff]
        %v592 = vld [vmem:[#allocation2 + $0x7a] sm:$0xff]
        %v593 = vld [vmem:[#allocation2 + $0x82] sm:$0xff]
        %v594 = vld [vmem:[#allocation2 + $0x92] sm:$0xff]
        %v595 = vld [vmem:[#allocation2 + $0x9a] sm:$0xff]
        %v596 = vld [vmem:[#allocation2 + $0xaa] sm:$0xff]
        %v597 = vld [vmem:[#allocation2 + $0xb2] sm:$0xff]
        %v598 = vlaneseq
        %v599 = vshrl.u32 %v598, 7
        %v600 = vsub.s32 2, %v599
        %v601 = vrot.slane %v492, %v600
        %v602 = vmul.f32 %v582, %v601
        %v603 = vmul.f32 %v583, %v601
        %v604 = vmul.f32 %v584, %v601
        %v605 = vmul.f32 %v585, %v601
        %v606 = vmul.f32 %v586, %v601
        %v607 = vmul.f32 %v587, %v601
        %v608 = vmul.f32 %v588, %v601
        %v609 = vmul.f32 %v589, %v601
        %v610 = vmul.f32 %v590, %v601
        %v611 = vmul.f32 %v591, %v601
        %v612 = vmul.f32 %v592, %v601
        %v613 = vmul.f32 %v593, %v601
        %v614 = vmul.f32 %v594, %v601
        %v615 = vmul.f32 %v595, %v601
        %v616 = vmul.f32 %v596, %v601
        %v617 = vmul.f32 %v597, %v601
        %v618 = vadd.f32 %v566, %v602
        %v619 = vadd.f32 %v567, %v603
        %v620 = vadd.f32 %v568, %v604
        %v621 = vadd.f32 %v569, %v605
        %v622 = vadd.f32 %v570, %v606
        %v623 = vadd.f32 %v571, %v607
        %v624 = vadd.f32 %v572, %v608
        %v625 = vadd.f32 %v573, %v609
        %v626 = vadd.f32 %v574, %v610
        %v627 = vadd.f32 %v575, %v611
        %v628 = vadd.f32 %v576, %v612
        %v629 = vadd.f32 %v577, %v613
        %v630 = vadd.f32 %v578, %v614
        %v631 = vadd.f32 %v579, %v615
        %v632 = vadd.f32 %v580, %v616
        %v633 = vadd.f32 %v581, %v617
        %v634 = vld [vmem:[%s445] sm:$0xff]
        %v635 = vld [vmem:[%s445 + $0x8] sm:$0xff]
        %v636 = vld [vmem:[%s445 + $0x18] sm:$0xff]
        %v637 = vld [vmem:[%s445 + $0x20] sm:$0xff]
        %v638 = vld [vmem:[%s445 + $0x30] sm:$0xff]
        %v639 = vld [vmem:[%s445 + $0x38] sm:$0xff]
        %v640 = vld [vmem:[%s445 + $0x48] sm:$0xff]
        %v641 = vld [vmem:[%s445 + $0x50] sm:$0xff]
        %v642 = vld [vmem:[%s445 + $0x60] sm:$0xff]
        %v643 = vld [vmem:[%s445 + $0x68] sm:$0xff]
        %v644 = vld [vmem:[%s445 + $0x78] sm:$0xff]
        %v645 = vld [vmem:[%s445 + $0x80] sm:$0xff]
        %v646 = vld [vmem:[%s445 + $0x90] sm:$0xff]
        %v647 = vld [vmem:[%s445 + $0x98] sm:$0xff]
        %v648 = vld [vmem:[%s445 + $0xa8] sm:$0xff]
        %v649 = vld [vmem:[%s445 + $0xb0] sm:$0xff]
        %v650 = vlaneseq
        %v651 = vshrl.u32 %v650, 7
        %v652 = vsub.s32 3, %v651
        %v653 = vrot.slane %v492, %v652
        %v654 = vmul.f32 %v634, %v653
        %v655 = vmul.f32 %v635, %v653
        %v656 = vmul.f32 %v636, %v653
        %v657 = vmul.f32 %v637, %v653
        %v658 = vmul.f32 %v638, %v653
        %v659 = vmul.f32 %v639, %v653
        %v660 = vmul.f32 %v640, %v653
        %v661 = vmul.f32 %v641, %v653
        %v662 = vmul.f32 %v642, %v653
        %v663 = vmul.f32 %v643, %v653
        %v664 = vmul.f32 %v644, %v653
        %v665 = vmul.f32 %v645, %v653
        %v666 = vmul.f32 %v646, %v653
        %v667 = vmul.f32 %v647, %v653
        %v668 = vmul.f32 %v648, %v653
        %v669 = vmul.f32 %v649, %v653
        %v670 = vadd.f32 %v618, %v654
        %v671 = vadd.f32 %v619, %v655
        %v672 = vadd.f32 %v620, %v656
        %v673 = vadd.f32 %v621, %v657
        %v674 = vadd.f32 %v622, %v658
        %v675 = vadd.f32 %v623, %v659
        %v676 = vadd.f32 %v624, %v660
        %v677 = vadd.f32 %v625, %v661
        %v678 = vadd.f32 %v626, %v662
        %v679 = vadd.f32 %v627, %v663
        %v680 = vadd.f32 %v628, %v664
        %v681 = vadd.f32 %v629, %v665
        %v682 = vadd.f32 %v630, %v666
        %v683 = vadd.f32 %v631, %v667
        %v684 = vadd.f32 %v632, %v668
        %v685 = vadd.f32 %v633, %v669
        %v686 = vld [vmem:[%s445 + $0x1] sm:$0xff]
        %v687 = vld [vmem:[%s445 + $0x9] sm:$0xff]
        %v688 = vld [vmem:[%s445 + $0x19] sm:$0xff]
        %v689 = vld [vmem:[%s445 + $0x21] sm:$0xff]
        %v690 = vld [vmem:[%s445 + $0x31] sm:$0xff]
        %v691 = vld [vmem:[%s445 + $0x39] sm:$0xff]
        %v692 = vld [vmem:[%s445 + $0x49] sm:$0xff]
        %v693 = vld [vmem:[%s445 + $0x51] sm:$0xff]
        %v694 = vld [vmem:[%s445 + $0x61] sm:$0xff]
        %v695 = vld [vmem:[%s445 + $0x69] sm:$0xff]
        %v696 = vld [vmem:[%s445 + $0x79] sm:$0xff]
        %v697 = vld [vmem:[%s445 + $0x81] sm:$0xff]
        %v698 = vld [vmem:[%s445 + $0x91] sm:$0xff]
        %v699 = vld [vmem:[%s445 + $0x99] sm:$0xff]
        %v700 = vld [vmem:[%s445 + $0xa9] sm:$0xff]
        %v701 = vld [vmem:[%s445 + $0xb1] sm:$0xff]
        %v702 = vlaneseq
        %v703 = vshrl.u32 %v702, 7
        %v704 = vsub.s32 4, %v703
        %v705 = vrot.slane %v492, %v704
        %v706 = vmul.f32 %v686, %v705
        %v707 = vmul.f32 %v687, %v705
        %v708 = vmul.f32 %v688, %v705
        %v709 = vmul.f32 %v689, %v705
        %v710 = vmul.f32 %v690, %v705
        %v711 = vmul.f32 %v691, %v705
        %v712 = vmul.f32 %v692, %v705
        %v713 = vmul.f32 %v693, %v705
        %v714 = vmul.f32 %v694, %v705
        %v715 = vmul.f32 %v695, %v705
        %v716 = vmul.f32 %v696, %v705
        %v717 = vmul.f32 %v697, %v705
        %v718 = vmul.f32 %v698, %v705
        %v719 = vmul.f32 %v699, %v705
        %v720 = vmul.f32 %v700, %v705
        %v721 = vmul.f32 %v701, %v705
        %v722 = vadd.f32 %v670, %v706
        %v723 = vadd.f32 %v671, %v707
        %v724 = vadd.f32 %v672, %v708
        %v725 = vadd.f32 %v673, %v709
        %v726 = vadd.f32 %v674, %v710
        %v727 = vadd.f32 %v675, %v711
        %v728 = vadd.f32 %v676, %v712
        %v729 = vadd.f32 %v677, %v713
        %v730 = vadd.f32 %v678, %v714
        %v731 = vadd.f32 %v679, %v715
        %v732 = vadd.f32 %v680, %v716
        %v733 = vadd.f32 %v681, %v717
        %v734 = vadd.f32 %v682, %v718
        %v735 = vadd.f32 %v683, %v719
        %v736 = vadd.f32 %v684, %v720
        %v737 = vadd.f32 %v685, %v721
        %v738 = vld [vmem:[%s445 + $0x2] sm:$0xff]
        %v739 = vld [vmem:[%s445 + $0xa] sm:$0xff]
        %v740 = vld [vmem:[%s445 + $0x1a] sm:$0xff]
        %v741 = vld [vmem:[%s445 + $0x22] sm:$0xff]
        %v742 = vld [vmem:[%s445 + $0x32] sm:$0xff]
        %v743 = vld [vmem:[%s445 + $0x3a] sm:$0xff]
        %v744 = vld [vmem:[%s445 + $0x4a] sm:$0xff]
        %v745 = vld [vmem:[%s445 + $0x52] sm:$0xff]
        %v746 = vld [vmem:[%s445 + $0x62] sm:$0xff]
        %v747 = vld [vmem:[%s445 + $0x6a] sm:$0xff]
        %v748 = vld [vmem:[%s445 + $0x7a] sm:$0xff]
        %v749 = vld [vmem:[%s445 + $0x82] sm:$0xff]
        %v750 = vld [vmem:[%s445 + $0x92] sm:$0xff]
        %v751 = vld [vmem:[%s445 + $0x9a] sm:$0xff]
        %v752 = vld [vmem:[%s445 + $0xaa] sm:$0xff]
        %v753 = vld [vmem:[%s445 + $0xb2] sm:$0xff]
        %v754 = vlaneseq
        %v755 = vshrl.u32 %v754, 7
        %v756 = vsub.s32 5, %v755
        %v757 = vrot.slane %v492, %v756
        %v758 = vmul.f32 %v738, %v757
        %v759 = vmul.f32 %v739, %v757
        %v760 = vmul.f32 %v740, %v757
        %v761 = vmul.f32 %v741, %v757
        %v762 = vmul.f32 %v742, %v757
        %v763 = vmul.f32 %v743, %v757
        %v764 = vmul.f32 %v744, %v757
        %v765 = vmul.f32 %v745, %v757
        %v766 = vmul.f32 %v746, %v757
        %v767 = vmul.f32 %v747, %v757
        %v768 = vmul.f32 %v748, %v757
        %v769 = vmul.f32 %v749, %v757
        %v770 = vmul.f32 %v750, %v757
        %v771 = vmul.f32 %v751, %v757
        %v772 = vmul.f32 %v752, %v757
        %v773 = vmul.f32 %v753, %v757
        %v774 = vadd.f32 %v722, %v758
        %v775 = vadd.f32 %v723, %v759
        %v776 = vadd.f32 %v724, %v760
        %v777 = vadd.f32 %v725, %v761
        %v778 = vadd.f32 %v726, %v762
        %v779 = vadd.f32 %v727, %v763
        %v780 = vadd.f32 %v728, %v764
        %v781 = vadd.f32 %v729, %v765
        %v782 = vadd.f32 %v730, %v766
        %v783 = vadd.f32 %v731, %v767
        %v784 = vadd.f32 %v732, %v768
        %v785 = vadd.f32 %v733, %v769
        %v786 = vadd.f32 %v734, %v770
        %v787 = vadd.f32 %v735, %v771
        %v788 = vadd.f32 %v736, %v772
        %v789 = vadd.f32 %v737, %v773
        %s790 = scalar_lea.vmem [#allocation2], 48
        %v791 = vld [vmem:[%s790] sm:$0xff]
        %v792 = vld [vmem:[%s790 + $0x8] sm:$0xff]
        %v793 = vld [vmem:[%s790 + $0x18] sm:$0xff]
        %v794 = vld [vmem:[%s790 + $0x20] sm:$0xff]
        %v795 = vld [vmem:[%s790 + $0x30] sm:$0xff]
        %v796 = vld [vmem:[%s790 + $0x38] sm:$0xff]
        %v797 = vld [vmem:[%s790 + $0x48] sm:$0xff]
        %v798 = vld [vmem:[%s790 + $0x50] sm:$0xff]
        %v799 = vld [vmem:[%s790 + $0x60] sm:$0xff]
        %v800 = vld [vmem:[%s790 + $0x68] sm:$0xff]
        %v801 = vld [vmem:[%s790 + $0x78] sm:$0xff]
        %v802 = vld [vmem:[%s790 + $0x80] sm:$0xff]
        %v803 = vld [vmem:[%s790 + $0x90] sm:$0xff]
        %v804 = vld [vmem:[%s790 + $0x98] sm:$0xff]
        %v805 = vld [vmem:[%s790 + $0xa8] sm:$0xff]
        %v806 = vld [vmem:[%s790 + $0xb0] sm:$0xff]
        %v807 = vlaneseq
        %v808 = vshrl.u32 %v807, 7
        %v809 = vsub.s32 6, %v808
        %v810 = vrot.slane %v492, %v809
        %v811 = vmul.f32 %v791, %v810
        %v812 = vmul.f32 %v792, %v810
        %v813 = vmul.f32 %v793, %v810
        %v814 = vmul.f32 %v794, %v810
        %v815 = vmul.f32 %v795, %v810
        %v816 = vmul.f32 %v796, %v810
        %v817 = vmul.f32 %v797, %v810
        %v818 = vmul.f32 %v798, %v810
        %v819 = vmul.f32 %v799, %v810
        %v820 = vmul.f32 %v800, %v810
        %v821 = vmul.f32 %v801, %v810
        %v822 = vmul.f32 %v802, %v810
        %v823 = vmul.f32 %v803, %v810
        %v824 = vmul.f32 %v804, %v810
        %v825 = vmul.f32 %v805, %v810
        %v826 = vmul.f32 %v806, %v810
        %v827 = vadd.f32 %v774, %v811
        %v828 = vadd.f32 %v775, %v812
        %v829 = vadd.f32 %v776, %v813
        %v830 = vadd.f32 %v777, %v814
        %v831 = vadd.f32 %v778, %v815
        %v832 = vadd.f32 %v779, %v816
        %v833 = vadd.f32 %v780, %v817
        %v834 = vadd.f32 %v781, %v818
        %v835 = vadd.f32 %v782, %v819
        %v836 = vadd.f32 %v783, %v820
        %v837 = vadd.f32 %v784, %v821
        %v838 = vadd.f32 %v785, %v822
        %v839 = vadd.f32 %v786, %v823
        %v840 = vadd.f32 %v787, %v824
        %v841 = vadd.f32 %v788, %v825
        %v842 = vadd.f32 %v789, %v826
        %v843 = vld [vmem:[%s790 + $0x1] sm:$0xff]
        %v844 = vld [vmem:[%s790 + $0x9] sm:$0xff]
        %v845 = vld [vmem:[%s790 + $0x19] sm:$0xff]
        %v846 = vld [vmem:[%s790 + $0x21] sm:$0xff]
        %v847 = vld [vmem:[%s790 + $0x31] sm:$0xff]
        %v848 = vld [vmem:[%s790 + $0x39] sm:$0xff]
        %v849 = vld [vmem:[%s790 + $0x49] sm:$0xff]
        %v850 = vld [vmem:[%s790 + $0x51] sm:$0xff]
        %v851 = vld [vmem:[%s790 + $0x61] sm:$0xff]
        %v852 = vld [vmem:[%s790 + $0x69] sm:$0xff]
        %v853 = vld [vmem:[%s790 + $0x79] sm:$0xff]
        %v854 = vld [vmem:[%s790 + $0x81] sm:$0xff]
        %v855 = vld [vmem:[%s790 + $0x91] sm:$0xff]
        %v856 = vld [vmem:[%s790 + $0x99] sm:$0xff]
        %v857 = vld [vmem:[%s790 + $0xa9] sm:$0xff]
        %v858 = vld [vmem:[%s790 + $0xb1] sm:$0xff]
        %v859 = vlaneseq
        %v860 = vshrl.u32 %v859, 7
        %v861 = vsub.s32 7, %v860
        %v862 = vrot.slane %v492, %v861
        %v863 = vmul.f32 %v843, %v862
        %v864 = vmul.f32 %v844, %v862
        %v865 = vmul.f32 %v845, %v862
        %v866 = vmul.f32 %v846, %v862
        %v867 = vmul.f32 %v847, %v862
        %v868 = vmul.f32 %v848, %v862
        %v869 = vmul.f32 %v849, %v862
        %v870 = vmul.f32 %v850, %v862
        %v871 = vmul.f32 %v851, %v862
        %v872 = vmul.f32 %v852, %v862
        %v873 = vmul.f32 %v853, %v862
        %v874 = vmul.f32 %v854, %v862
        %v875 = vmul.f32 %v855, %v862
        %v876 = vmul.f32 %v856, %v862
        %v877 = vmul.f32 %v857, %v862
        %v878 = vmul.f32 %v858, %v862
        %v879 = vadd.f32 %v827, %v863
        %v880 = vadd.f32 %v828, %v864
        %v881 = vadd.f32 %v829, %v865
        %v882 = vadd.f32 %v830, %v866
        %v883 = vadd.f32 %v831, %v867
        %v884 = vadd.f32 %v832, %v868
        %v885 = vadd.f32 %v833, %v869
        %v886 = vadd.f32 %v834, %v870
        %v887 = vadd.f32 %v835, %v871
        %v888 = vadd.f32 %v836, %v872
        %v889 = vadd.f32 %v837, %v873
        %v890 = vadd.f32 %v838, %v874
        %v891 = vadd.f32 %v839, %v875
        %v892 = vadd.f32 %v840, %v876
        %v893 = vadd.f32 %v841, %v877
        %v894 = vadd.f32 %v842, %v878
        %v895 = vld [vmem:[%s790 + $0x2] sm:$0xff]
        %v896 = vld [vmem:[%s790 + $0xa] sm:$0xff]
        %v897 = vld [vmem:[%s790 + $0x1a] sm:$0xff]
        %v898 = vld [vmem:[%s790 + $0x22] sm:$0xff]
        %v899 = vld [vmem:[%s790 + $0x32] sm:$0xff]
        %v900 = vld [vmem:[%s790 + $0x3a] sm:$0xff]
        %v901 = vld [vmem:[%s790 + $0x4a] sm:$0xff]
        %v902 = vld [vmem:[%s790 + $0x52] sm:$0xff]
        %v903 = vld [vmem:[%s790 + $0x62] sm:$0xff]
        %v904 = vld [vmem:[%s790 + $0x6a] sm:$0xff]
        %v905 = vld [vmem:[%s790 + $0x7a] sm:$0xff]
        %v906 = vld [vmem:[%s790 + $0x82] sm:$0xff]
        %v907 = vld [vmem:[%s790 + $0x92] sm:$0xff]
        %v908 = vld [vmem:[%s790 + $0x9a] sm:$0xff]
        %v909 = vld [vmem:[%s790 + $0xaa] sm:$0xff]
        %v910 = vld [vmem:[%s790 + $0xb2] sm:$0xff]
        %v911 = vlaneseq
        %v912 = vshrl.u32 %v911, 7
        %v913 = vsub.s32 0, %v912
        %v914 = vrot.slane %v493, %v913
        %v915 = vmul.f32 %v895, %v914
        %v916 = vmul.f32 %v896, %v914
        %v917 = vmul.f32 %v897, %v914
        %v918 = vmul.f32 %v898, %v914
        %v919 = vmul.f32 %v899, %v914
        %v920 = vmul.f32 %v900, %v914
        %v921 = vmul.f32 %v901, %v914
        %v922 = vmul.f32 %v902, %v914
        %v923 = vmul.f32 %v903, %v914
        %v924 = vmul.f32 %v904, %v914
        %v925 = vmul.f32 %v905, %v914
        %v926 = vmul.f32 %v906, %v914
        %v927 = vmul.f32 %v907, %v914
        %v928 = vmul.f32 %v908, %v914
        %v929 = vmul.f32 %v909, %v914
        %v930 = vmul.f32 %v910, %v914
        %v931 = vadd.f32 %v879, %v915
        %v932 = vadd.f32 %v880, %v916
        %v933 = vadd.f32 %v881, %v917
        %v934 = vadd.f32 %v882, %v918
        %v935 = vadd.f32 %v883, %v919
        %v936 = vadd.f32 %v884, %v920
        %v937 = vadd.f32 %v885, %v921
        %v938 = vadd.f32 %v886, %v922
        %v939 = vadd.f32 %v887, %v923
        %v940 = vadd.f32 %v888, %v924
        %v941 = vadd.f32 %v889, %v925
        %v942 = vadd.f32 %v890, %v926
        %v943 = vadd.f32 %v891, %v927
        %v944 = vadd.f32 %v892, %v928
        %v945 = vadd.f32 %v893, %v929
        %v946 = vadd.f32 %v894, %v930
        %v947 = vpack.c.bf16 %v932, %v931
        %v948 = vpack.c.bf16 %v934, %v933
        %v949 = vpack.c.bf16 %v936, %v935
        %v950 = vpack.c.bf16 %v938, %v937
        %v951 = vpack.c.bf16 %v940, %v939
        %v952 = vpack.c.bf16 %v942, %v941
        %v953 = vpack.c.bf16 %v944, %v943
        %v954 = vpack.c.bf16 %v946, %v945
        %v963 = vunpack.c.l.b16 %v947
        %v964 = vunpack.c.h.b16 %v947
        %v965 = vunpack.c.l.b16 %v948
        %v966 = vunpack.c.h.b16 %v948
        %v967 = vunpack.c.l.b16 %v949
        %v968 = vunpack.c.h.b16 %v949
        %v969 = vunpack.c.l.b16 %v950
        %v970 = vunpack.c.h.b16 %v950
        %v971 = vunpack.c.l.b16 %v951
        %v972 = vunpack.c.h.b16 %v951
        %v973 = vunpack.c.l.b16 %v952
        %v974 = vunpack.c.h.b16 %v952
        %v975 = vunpack.c.l.b16 %v953
        %v976 = vunpack.c.h.b16 %v953
        %v977 = vunpack.c.l.b16 %v954
        %v978 = vunpack.c.h.b16 %v954
        %v979 = vpack.c.b16 %v963, %v963
        %v980 = vpack.c.b16 %v964, %v964
        %v981 = vpack.c.b16 %v965, %v965
        %v982 = vpack.c.b16 %v966, %v966
        %v983 = vpack.c.b16 %v967, %v967
        %v984 = vpack.c.b16 %v968, %v968
        %v985 = vpack.c.b16 %v969, %v969
        %v986 = vpack.c.b16 %v970, %v970
        %v987 = vpack.c.b16 %v971, %v971
        %v988 = vpack.c.b16 %v972, %v972
        %v989 = vpack.c.b16 %v973, %v973
        %v990 = vpack.c.b16 %v974, %v974
        %v991 = vpack.c.b16 %v975, %v975
        %v992 = vpack.c.b16 %v976, %v976
        %v993 = vpack.c.b16 %v977, %v977
        %v994 = vpack.c.b16 %v978, %v978
        %1011 = vst [vmem:[%s391] sm:$0xf] %v979
        %1012 = vst [vmem:[%s391 + $0x4] sm:$0xf] %v980
        %1013 = vst [vmem:[%s391 + $0x8] sm:$0xf] %v981
        %1014 = vst [vmem:[%s391 + $0xc] sm:$0xf] %v982
        %1015 = vst [vmem:[%s391 + $0x10] sm:$0xf] %v983
        %1016 = vst [vmem:[%s391 + $0x14] sm:$0xf] %v984
        %1017 = vst [vmem:[%s391 + $0x18] sm:$0xf] %v985
        %1018 = vst [vmem:[%s391 + $0x1c] sm:$0xf] %v986
        %1019 = vst [vmem:[%s391 + $0x20] sm:$0xf] %v987
        %1020 = vst [vmem:[%s391 + $0x24] sm:$0xf] %v988
        %1021 = vst [vmem:[%s391 + $0x28] sm:$0xf] %v989
        %1022 = vst [vmem:[%s391 + $0x2c] sm:$0xf] %v990
        %1023 = vst [vmem:[%s391 + $0x30] sm:$0xf] %v991
        %1024 = vst [vmem:[%s391 + $0x34] sm:$0xf] %v992
        %1025 = vst [vmem:[%s391 + $0x38] sm:$0xf] %v993
        %1026 = vst [vmem:[%s391 + $0x3c] sm:$0xf] %v994
        %v1027 = vadd.f32 %v931, %v933
        %v1028 = vadd.f32 %v1027, %v935
        %v1029 = vadd.f32 %v1028, %v937
        %v1030 = vadd.f32 %v1029, %v939
        %v1031 = vadd.f32 %v1030, %v941
        %v1032 = vadd.f32 %v1031, %v943
        %v1033 = vadd.f32 %v1032, %v945
        %v1034 = vadd.f32 %v932, %v934
        %v1035 = vadd.f32 %v1034, %v936
        %v1036 = vadd.f32 %v1035, %v938
        %v1037 = vadd.f32 %v1036, %v940
        %v1038 = vadd.f32 %v1037, %v942
        %v1039 = vadd.f32 %v1038, %v944
        %v1040 = vadd.f32 %v1039, %v946
        %v1041 = vadd.f32 %v1033, %v1040
        %v1042 = vrot.slane %v1041, 4
        %v1043 = vadd.f32 %v1041, %v1042
        %v1044 = vrot.slane %v1043, 2
        %v1045 = vadd.f32 %v1043, %v1044
        %v1046 = vrot.slane %v1045, 1
        %v1047 = vadd.f32 %v1045, %v1046
        %1048 = vst [vmem:[%s398] sm:$0x1] %v1047
        %v1049 = vmul.f32 %v931, %v931
        %v1050 = vmul.f32 %v932, %v932
        %v1051 = vmul.f32 %v933, %v933
        %v1052 = vmul.f32 %v934, %v934
        %v1053 = vmul.f32 %v935, %v935
        %v1054 = vmul.f32 %v936, %v936
        %v1055 = vmul.f32 %v937, %v937
        %v1056 = vmul.f32 %v938, %v938
        %v1057 = vmul.f32 %v939, %v939
        %v1058 = vmul.f32 %v940, %v940
        %v1059 = vmul.f32 %v941, %v941
        %v1060 = vmul.f32 %v942, %v942
        %v1061 = vmul.f32 %v943, %v943
        %v1062 = vmul.f32 %v944, %v944
        %v1063 = vmul.f32 %v945, %v945
        %v1064 = vmul.f32 %v946, %v946
        %v1065 = vadd.f32 %v1049, %v1051
        %v1066 = vadd.f32 %v1065, %v1053
        %v1067 = vadd.f32 %v1066, %v1055
        %v1068 = vadd.f32 %v1067, %v1057
        %v1069 = vadd.f32 %v1068, %v1059
        %v1070 = vadd.f32 %v1069, %v1061
        %v1071 = vadd.f32 %v1070, %v1063
        %v1072 = vadd.f32 %v1050, %v1052
        %v1073 = vadd.f32 %v1072, %v1054
        %v1074 = vadd.f32 %v1073, %v1056
        %v1075 = vadd.f32 %v1074, %v1058
        %v1076 = vadd.f32 %v1075, %v1060
        %v1077 = vadd.f32 %v1076, %v1062
        %v1078 = vadd.f32 %v1077, %v1064
        %v1079 = vadd.f32 %v1071, %v1078
        %v1080 = vrot.slane %v1079, 4
        %v1081 = vadd.f32 %v1079, %v1080
        %v1082 = vrot.slane %v1081, 2
        %v1083 = vadd.f32 %v1081, %v1082
        %v1084 = vrot.slane %v1083, 1
        %v1085 = vadd.f32 %v1083, %v1084
        %1086 = vst [vmem:[%s398 + $0x1] sm:$0x1] %v1085
        %s1087 = sand.u32 %s173, 1
        %s1088 = scalar_lea.sflag [#allocation5], %s1087
        %s1089 = sand.u32 %s173, 1
        %s1090 = smul.addr %s1089, 64
        %s1091 = scalar_lea.vmem [#allocation11], %s1090
        %s1092 = sand.u32 %s201, 1
        %s1093 = scalar_lea.sflag [#allocation13], %s1092
        %s1094 = sand.u32 %s201, 1
        %s1095 = smul.addr %s1094, 2
        %s1096 = scalar_lea.vmem [#allocation12], %s1095
        // Predicated region
        $region69: #{tpu_custom_call.1} parent=35 // pred_check
          %p1097 = pneg %p183
        $region70: #{tpu_custom_call.1} parent=35 // pred_check_branch
          %1099 = sbr.rel (%p1097) target = $region72
        $region71: #{tpu_custom_call.1} parent=35 // pred_region
          %s1100 = smul.u32 8, %s35
          %s1102 = ssub.s32 1024, 1024
          %1103 = vsyncadd %s1088, %s1102
          %s1104 = smul.addr %s1100, 2
          %s1105 = smul.addr %s34, 32
          %s1106 = sadd.s32 %s1104, %s1105
          %s1107 = smul.addr %s1106, 64
          %s1108 = scalar_lea.hbm %s4, %s1107
          %s1109 = sshll.u32 %s1091, 4
          %s1110 = int_to_ptr.vmem [resolvable:$true] %s1109
          %1115 = dma.vmem_to_hbm [thread:$0]  %s1110, 1024, %s1108, %s1088, 64, 64, 4
        $region72: #{tpu_custom_call.1} parent=35 // pred_fallthru
          _
        // Predicated region
        $region73: #{tpu_custom_call.1} parent=35 // pred_check
          %p1116 = pneg %p211
        $region74: #{tpu_custom_call.1} parent=35 // pred_check_branch
          %1118 = sbr.rel (%p1116) target = $region76
        $region75: #{tpu_custom_call.1} parent=35 // pred_region
          %s1120 = ssub.s32 32, 32
          %1121 = vsyncadd %s1093, %s1120
          %s1122 = smul.addr %s34, 2
          %s1123 = sadd.s32 %s35, %s1122
          %s1124 = smul.addr %s1123, 32
          %s1125 = scalar_lea.hbm %s5, %s1124
          %s1127 = sshll.u32 %s1096, 4
          %s1128 = int_to_ptr.vmem [resolvable:$true] %s1127
          %1130 = dma.vmem_to_hbm [thread:$0]  %s1128, 32, %s1125, %s1093
        $region76: #{tpu_custom_call.1} parent=35 // pred_fallthru
          _
      $region36: #{tpu_custom_call.1} parent=5 // pred_fallthru
        _
      %p1131 = scmp.le.s32.totalorder 2, %s25
      // Predicated region
      $region77: #{tpu_custom_call.1} parent=5 // pred_check
        %p1132 = pneg %p1131
      $region78: #{tpu_custom_call.1} parent=5 // pred_check_branch
        %1134 = sbr.rel (%p1132) target = $region80
      $region79: #{tpu_custom_call.1} parent=5 // pred_region
        %s1135 = ssub.s32 %s25, 2
        // Predicated region
        $region81: #{tpu_custom_call.1} parent=79 // pred_check
          %p1136 = pneg %p189
        $region82: #{tpu_custom_call.1} parent=79 // pred_check_branch
          %1138 = sbr.rel (%p1136) target = $region84
        $region83: #{tpu_custom_call.1} parent=79 // pred_region
          %s1139 = sand.u32 %s174, 1
          %s1140 = scalar_lea.sflag [#allocation5], %s1139
          %s1141 = sand.u32 %s174, 1
          %s1142 = smul.addr %s1141, 64
          %s1143 = scalar_lea.vmem [#allocation11], %s1142
          %1144 = dma.done %s1140, 1024
        $region84: #{tpu_custom_call.1} parent=79 // pred_fallthru
          _
        // Predicated region
        $region85: #{tpu_custom_call.1} parent=79 // pred_check
          %p1145 = pneg %p217
        $region86: #{tpu_custom_call.1} parent=79 // pred_check_branch
          %1147 = sbr.rel (%p1145) target = $region88
        $region87: #{tpu_custom_call.1} parent=79 // pred_region
          %s1148 = sand.u32 %s202, 1
          %s1149 = scalar_lea.sflag [#allocation13], %s1148
          %s1150 = sand.u32 %s202, 1
          %s1151 = smul.addr %s1150, 2
          %s1152 = scalar_lea.vmem [#allocation12], %s1151
          %1153 = dma.done %s1149, 32
        $region88: #{tpu_custom_call.1} parent=79 // pred_fallthru
          _
      $region80: #{tpu_custom_call.1} parent=5 // pred_fallthru
        _
    $region6: #{tpu_custom_call.1} parent=1 // loop_footer
      %s29 = sadd.s32 1, %s25
    $region7: #{tpu_custom_call.1} parent=1 // loop_footer_branch
      %24 = sbr.rel target = $region3
    $region8: #{tpu_custom_call.1} parent=1 // loop_exit
      _
    %1154 = vsyncpa [#allocation4], 1
    %s1155 = scalar_lea.sflag [#allocation4], 1
    %1156 = vsyncpa %s1155, 1
    %1157 = vsyncpa [#allocation7], 1
    %s1158 = scalar_lea.sflag [#allocation7], 1
    %1159 = vsyncpa %s1158, 1
    %1160 = vsyncpa [#allocation10], 1
    %1161 = vsyncpa [#allocation5], 1
    %s1162 = scalar_lea.sflag [#allocation5], 1
    %1163 = vsyncpa %s1162, 1
    %1164 = vsyncpa [#allocation13], 1
    %s1165 = scalar_lea.sflag [#allocation13], 1
    %1166 = vsyncpa %s1165, 1

</llo_original>
